<compile_context>
chip_gen: v7x
topology: tpu7x:2x2x1
jax: 0.10.0
libtpu: 0.0.40
codegen_flags: <defaults>
</compile_context>

<pallas_src>
import jax
import jax.numpy as jnp
from jax.experimental import pallas as pl
from jax.experimental.pallas import tpu as pltpu

KH = KW = 3
PAD = 1
BN_EPS = 1e-5


def _fused_dwsep_bn_relu_kernel(x_ref, wf_ref, gamma_ref, beta_ref, out_ref,
                                sum_ref, ssq_ref):
    """One grid step = one batch element; last step finalizes BN + ReLU.

    x_ref:     (1, Cin, H, W)      unpadded NCHW input tile (f32)
    wf_ref:    (Cout, KH*KW*Cin)   fused depthwise x pointwise weights (f32)
    gamma_ref: (Cout, 1)           BN gamma
    beta_ref:  (Cout, 1)           BN beta
    out_ref:   (N, Cout, H*W)      full output, VMEM-resident across the grid
    sum_ref:   (Cout, 1)  scratch  running per-channel sum of conv output
    ssq_ref:   (Cout, 1)  scratch  running per-channel sum of squares
    """
    i = pl.program_id(0)
    _, cin, h, w = x_ref.shape
    hw = h * w
    nb = out_ref.shape[0]          # static batch size

    @pl.when(i == 0)
    def _():
        sum_ref[...] = jnp.zeros_like(sum_ref)
        ssq_ref[...] = jnp.zeros_like(ssq_ref)

    # ---- In-VMEM zero halo (PyTorch padding=1); no padded copy in HBM.
    x = x_ref[0]                                               # (Cin, H, W)
    zr = jnp.zeros((cin, PAD, w), jnp.float32)
    xp = jnp.concatenate([zr, x, zr], axis=1)                  # (Cin, H+2, W)
    zc = jnp.zeros((cin, h + 2 * PAD, PAD), jnp.float32)
    xp = jnp.concatenate([zc, xp, zc], axis=2)                 # (Cin, H+2, W+2)

    # ---- Depthwise(3x3) + pointwise(1x1) as ONE matmul with K = 9*Cin.
    # RHS row index = k*Cin + c, matching the fused-weight layout built in the
    # wrapper.  (Tap shifts are small static VMEM slices; relayout cost is
    # negligible at these tile sizes.)
    patches = [xp[:, kh:kh + h, kw:kw + w]
               for kh in range(KH) for kw in range(KW)]        # 9 x (Cin,H,W)
    rhs = jnp.concatenate(patches, axis=0).reshape(KH * KW * cin, hw)
    y = jnp.dot(wf_ref[...], rhs,
                preferred_element_type=jnp.float32)            # (Cout, H*W)

    # ---- BN partial statistics, accumulated across the (arbitrary) batch axis.
    sum_ref[...] += jnp.sum(y, axis=1, keepdims=True)          # (Cout, 1)
    ssq_ref[...] += jnp.sum(y * y, axis=1, keepdims=True)

    # Stash this element's conv output in the VMEM-resident output block
    # (already NCHW-ordered, lane-dense minor dim H*W).
    out_ref[i] = y

    # ---- Last step: fold stats, apply BN + ReLU in place, single HBM write.
    @pl.when(i == pl.num_programs(0) - 1)
    def _():
        inv_count = 1.0 / float(nb * hw)
        mean = sum_ref[...] * inv_count                        # (Cout, 1)
        var = jnp.maximum(ssq_ref[...] * inv_count - mean * mean, 0.0)
        scale = gamma_ref[...] * jax.lax.rsqrt(var + BN_EPS)   # (Cout, 1)
        shift = beta_ref[...] - mean * scale
        yall = out_ref[...]                                    # (N, Cout, H*W)
        out_ref[...] = jnp.maximum(
            yall * scale[None, :, :] + shift[None, :, :], 0.0)
        # Dropout(p=0.0) == identity.


def depthwise_separable_conv(x_nchw, w_dw, w_pw, gamma, beta):
    """Forward pass of DepthwiseSeparableConv. x: NCHW f32. Returns NCHW f32."""
    n, cin, h, w = x_nchw.shape
    cout = w_pw.shape[0]
    hw = h * w

    # Fused weights: W[o, k*Cin + c] = w_pw[o,c] * w_dw[c,0,kh,kw], k = kh*KW+kw.
    wdw2 = w_dw.astype(jnp.float32).reshape(cin, KH * KW)          # (c, k)
    wpw2 = w_pw.astype(jnp.float32).reshape(cout, cin)             # (o, c)
    wf = (wpw2[:, None, :] * jnp.transpose(wdw2)[None, :, :]
          ).reshape(cout, KH * KW * cin)                           # (o, k*Cin+c)
    gamma2 = gamma.astype(jnp.float32).reshape(cout, 1)
    beta2 = beta.astype(jnp.float32).reshape(cout, 1)

    out_flat = pl.pallas_call(
        _fused_dwsep_bn_relu_kernel,
        grid=(n,),
        in_specs=[
            pl.BlockSpec((1, cin, h, w), lambda i: (i, 0, 0, 0)),
            pl.BlockSpec((cout, KH * KW * cin), lambda i: (0, 0)),
            pl.BlockSpec((cout, 1), lambda i: (0, 0)),
            pl.BlockSpec((cout, 1), lambda i: (0, 0)),
        ],
        # Constant block index -> the whole output stays VMEM-resident across
        # the batch axis and is written back to HBM once, lane-dense (H*W).
        out_specs=pl.BlockSpec((n, cout, hw), lambda i: (0, 0, 0)),
        out_shape=jax.ShapeDtypeStruct((n, cout, hw), jnp.float32),
        scratch_shapes=[
            pltpu.VMEM((cout, 1), jnp.float32),   # sum
            pltpu.VMEM((cout, 1), jnp.float32),   # sum of squares
        ],
        # Batch axis must be sequential: stats accumulate and the output block
        # is revisited / finalized at the last step.
        compiler_params=pltpu.CompilerParams(
            dimension_semantics=("arbitrary",)),
    )(x_nchw.astype(jnp.float32), wf, gamma2, beta2)

    # (N, Cout, H*W) -> (N, Cout, H, W): contiguous reshape, no data movement.
    return out_flat.reshape(n, cout, h, w)


def _reference(x, w_dw, w_pw, gamma, beta):
    """Pure-JAX f32 reference: depthwise conv -> pointwise conv -> BN -> ReLU."""
    hi = jax.lax.Precision.HIGHEST
    cin = x.shape[1]
    dw = jax.lax.conv_general_dilated(
        x, w_dw, window_strides=(1, 1), padding=((PAD, PAD), (PAD, PAD)),
        dimension_numbers=("NCHW", "OIHW", "NCHW"),
        feature_group_count=cin, precision=hi)
    y = jax.lax.conv_general_dilated(
        dw, w_pw, window_strides=(1, 1), padding=((0, 0), (0, 0)),
        dimension_numbers=("NCHW", "OIHW", "NCHW"), precision=hi)
    mean = jnp.mean(y, axis=(0, 2, 3), keepdims=True)
    var = jnp.mean(jnp.square(y - mean), axis=(0, 2, 3), keepdims=True)
    y = (y - mean) * jax.lax.rsqrt(var + BN_EPS)
    y = y * gamma.reshape(1, -1, 1, 1) + beta.reshape(1, -1, 1, 1)
    return jnp.maximum(y, 0.0)  # Dropout(p=0.0) == identity


if __name__ == "__main__":
    key = jax.random.PRNGKey(0)
    k_x, k_dw, k_pw, k_g, k_b = jax.random.split(key, 5)

    N, Cin, Cout, H, W = 2, 4, 8, 16, 16

    x = jax.random.normal(k_x, (N, Cin, H, W), dtype=jnp.float32)
    # Deterministic synthetic parameters (not a checkpoint load).
    w_dw = 0.1 * jax.random.normal(k_dw, (Cin, 1, KH, KW), dtype=jnp.float32)
    w_pw = 0.1 * jax.random.normal(k_pw, (Cout, Cin, 1, 1), dtype=jnp.float32)
    gamma = 1.0 + 0.1 * jax.random.normal(k_g, (Cout,), dtype=jnp.float32)
    beta = 0.1 * jax.random.normal(k_b, (Cout,), dtype=jnp.float32)

    out = jax.block_until_ready(depthwise_separable_conv(x, w_dw, w_pw, gamma, beta))
    ref = jax.block_until_ready(_reference(x, w_dw, w_pw, gamma, beta))

    assert out.shape == (N, Cout, H, W)
    # All in-kernel math is f32; tolerance absorbs a possibly reduced-precision
    # (bf16-pass) MXU path for f32 matmul operands, amplified by BN scaling.
    assert jnp.allclose(out, ref, rtol=3e-2, atol=3e-2), "mismatch vs reference"

    print("KERNEL_OK")
</pallas_src>

<mosaic_0001>
module attributes {stable_mosaic.version = 11 : i64} {
  func.func @_fused_dwsep_bn_relu_kernel(%arg0: i32, %arg1: memref<1x4x16x16xf32, #tpu.memory_space<vmem>>, %arg2: memref<8x36xf32, #tpu.memory_space<vmem>>, %arg3: memref<8x1xf32, #tpu.memory_space<vmem>>, %arg4: memref<8x1xf32, #tpu.memory_space<vmem>>, %arg5: memref<2x8x256xf32, #tpu.memory_space<vmem>>, %arg6: memref<8x1xf32, #tpu.memory_space<vmem>>, %arg7: memref<8x1xf32, #tpu.memory_space<vmem>>) attributes {dimension_semantics = [#tpu.dimension_semantics<arbitrary>], iteration_bounds = array<i64: 2>, scalar_prefetch = 0 : i64, scratch_operands = 2 : i64, tpu.core_type = #tpu.core_type<tc>, window_params = [{transform_indices = @transform_0, window_bounds = array<i64: 1, 4, 16, 16>}, {pipeline_mode = #tpu.pipeline_mode<synchronous>, transform_indices = @transform_1, window_bounds = array<i64: 8, 36>}, {pipeline_mode = #tpu.pipeline_mode<synchronous>, transform_indices = @transform_2, window_bounds = array<i64: 8, 1>}, {pipeline_mode = #tpu.pipeline_mode<synchronous>, transform_indices = @transform_3, window_bounds = array<i64: 8, 1>}, {pipeline_mode = #tpu.pipeline_mode<synchronous>, transform_indices = @transform_4, window_bounds = array<i64: 2, 8, 256>}]} {
    %c0_i32 = arith.constant 0 : i32
    %0 = arith.cmpi eq, %arg0, %c0_i32 : i32
    %1 = arith.extui %0 : i1 to i32
    %c0_i32_0 = arith.constant 0 : i32
    %2 = arith.cmpi ne, %1, %c0_i32_0 : i32
    scf.if %2 {
      %cst_21 = arith.constant 0.000000e+00 : f32
      %40 = vector.broadcast %cst_21 : f32 to vector<8x1xf32>
      %c0_22 = arith.constant 0 : index
      %c0_23 = arith.constant 0 : index
      %41 = vector.load %arg6[%c0_22, %c0_23] : memref<8x1xf32, #tpu.memory_space<vmem>>, vector<8x1xf32>
      tpu.vector_store %arg6[%c0_22, %c0_23], %40 {strides = array<i32>} : memref<8x1xf32, #tpu.memory_space<vmem>>, vector<8x1xf32>,
      %cst_24 = arith.constant 0.000000e+00 : f32
      %42 = vector.broadcast %cst_24 : f32 to vector<8x1xf32>
      %c0_25 = arith.constant 0 : index
      %c0_26 = arith.constant 0 : index
      %43 = vector.load %arg7[%c0_25, %c0_26] : memref<8x1xf32, #tpu.memory_space<vmem>>, vector<8x1xf32>
      tpu.vector_store %arg7[%c0_25, %c0_26], %42 {strides = array<i32>} : memref<8x1xf32, #tpu.memory_space<vmem>>, vector<8x1xf32>,
    } else {
    }
    %c0 = arith.constant 0 : index
    %c0_1 = arith.constant 0 : index
    %c0_2 = arith.constant 0 : index
    %c0_3 = arith.constant 0 : index
    %3 = vector.load %arg1[%c0, %c0_1, %c0_2, %c0_3] : memref<1x4x16x16xf32, #tpu.memory_space<vmem>>, vector<1x4x16x16xf32>
    %4 = vector.shape_cast %3 : vector<1x4x16x16xf32> to vector<4x16x16xf32>
    %cst = arith.constant 0.000000e+00 : f32
    %5 = vector.broadcast %cst : f32 to vector<4x1x16xf32>
    %6 = tpu.concatenate %5, %4, %5 in 1 : vector<4x1x16xf32>, vector<4x16x16xf32>, vector<4x1x16xf32> -> vector<4x18x16xf32>
    %cst_4 = arith.constant 0.000000e+00 : f32
    %7 = vector.broadcast %cst_4 : f32 to vector<4x18x1xf32>
    %8 = tpu.concatenate %7, %6, %7 in 2 : vector<4x18x1xf32>, vector<4x18x16xf32>, vector<4x18x1xf32> -> vector<4x18x18xf32>
    %9 = vector.extract_strided_slice %8 {offsets = [0, 0, 0], sizes = [4, 16, 16], strides = [1, 1, 1]} : vector<4x18x18xf32> to vector<4x16x16xf32>
    %10 = vector.extract_strided_slice %8 {offsets = [0, 0, 1], sizes = [4, 16, 16], strides = [1, 1, 1]} : vector<4x18x18xf32> to vector<4x16x16xf32>
    %11 = vector.extract_strided_slice %8 {offsets = [0, 0, 2], sizes = [4, 16, 16], strides = [1, 1, 1]} : vector<4x18x18xf32> to vector<4x16x16xf32>
    %12 = vector.extract_strided_slice %8 {offsets = [0, 1, 0], sizes = [4, 16, 16], strides = [1, 1, 1]} : vector<4x18x18xf32> to vector<4x16x16xf32>
    %13 = vector.extract_strided_slice %8 {offsets = [0, 1, 1], sizes = [4, 16, 16], strides = [1, 1, 1]} : vector<4x18x18xf32> to vector<4x16x16xf32>
    %14 = vector.extract_strided_slice %8 {offsets = [0, 1, 2], sizes = [4, 16, 16], strides = [1, 1, 1]} : vector<4x18x18xf32> to vector<4x16x16xf32>
    %15 = vector.extract_strided_slice %8 {offsets = [0, 2, 0], sizes = [4, 16, 16], strides = [1, 1, 1]} : vector<4x18x18xf32> to vector<4x16x16xf32>
    %16 = vector.extract_strided_slice %8 {offsets = [0, 2, 1], sizes = [4, 16, 16], strides = [1, 1, 1]} : vector<4x18x18xf32> to vector<4x16x16xf32>
    %17 = vector.extract_strided_slice %8 {offsets = [0, 2, 2], sizes = [4, 16, 16], strides = [1, 1, 1]} : vector<4x18x18xf32> to vector<4x16x16xf32>
    %18 = tpu.concatenate %9, %10, %11, %12, %13, %14, %15, %16, %17 in 0 : vector<4x16x16xf32>, vector<4x16x16xf32>, vector<4x16x16xf32>, vector<4x16x16xf32>, vector<4x16x16xf32>, vector<4x16x16xf32>, vector<4x16x16xf32>, vector<4x16x16xf32>, vector<4x16x16xf32> -> vector<36x16x16xf32>
    %19 = vector.shape_cast %18 : vector<36x16x16xf32> to vector<36x256xf32>
    %c0_5 = arith.constant 0 : index
    %c0_6 = arith.constant 0 : index
    %20 = vector.load %arg2[%c0_5, %c0_6] : memref<8x36xf32, #tpu.memory_space<vmem>>, vector<8x36xf32>
    %cst_7 = arith.constant dense<0.000000e+00> : vector<8x256xf32>
    %21 = tpu.matmul %20, %19, %cst_7 {dimension_numbers = #tpu.dot_dimension_numbers<[1], [0], [0], [1], [0, 0, 1, 1], [], []>} : vector<8x36xf32>, vector<36x256xf32>, vector<8x256xf32> -> vector<8x256xf32>
    %c0_8 = arith.constant 0 : index
    %c0_9 = arith.constant 0 : index
    %22 = vector.load %arg6[%c0_8, %c0_9] : memref<8x1xf32, #tpu.memory_space<vmem>>, vector<8x1xf32>
    %cst_10 = arith.constant dense<0.000000e+00> : vector<8xf32>
    %23 = vector.multi_reduction <add>, %21, %cst_10 [1] : vector<8x256xf32> to vector<8xf32>
    %24 = vector.shape_cast %23 : vector<8xf32> to vector<8x1xf32>
    %25 = arith.addf %22, %24 : vector<8x1xf32>
    %c0_11 = arith.constant 0 : index
    %c0_12 = arith.constant 0 : index
    %26 = vector.load %arg6[%c0_11, %c0_12] : memref<8x1xf32, #tpu.memory_space<vmem>>, vector<8x1xf32>
    tpu.vector_store %arg6[%c0_11, %c0_12], %25 {strides = array<i32>} : memref<8x1xf32, #tpu.memory_space<vmem>>, vector<8x1xf32>,
    %c0_13 = arith.constant 0 : index
    %c0_14 = arith.constant 0 : index
    %27 = vector.load %arg7[%c0_13, %c0_14] : memref<8x1xf32, #tpu.memory_space<vmem>>, vector<8x1xf32>
    %28 = arith.mulf %21, %21 : vector<8x256xf32>
    %cst_15 = arith.constant dense<0.000000e+00> : vector<8xf32>
    %29 = vector.multi_reduction <add>, %28, %cst_15 [1] : vector<8x256xf32> to vector<8xf32>
    %30 = vector.shape_cast %29 : vector<8xf32> to vector<8x1xf32>
    %31 = arith.addf %27, %30 : vector<8x1xf32>
    %c0_16 = arith.constant 0 : index
    %c0_17 = arith.constant 0 : index
    %32 = vector.load %arg7[%c0_16, %c0_17] : memref<8x1xf32, #tpu.memory_space<vmem>>, vector<8x1xf32>
    tpu.vector_store %arg7[%c0_16, %c0_17], %31 {strides = array<i32>} : memref<8x1xf32, #tpu.memory_space<vmem>>, vector<8x1xf32>,
    %33 = arith.index_cast %arg0 : i32 to index
    %c0_18 = arith.constant 0 : index
    %c0_19 = arith.constant 0 : index
    %34 = vector.load %arg5[%33, %c0_18, %c0_19] : memref<2x8x256xf32, #tpu.memory_space<vmem>>, vector<1x8x256xf32>
    %35 = vector.shape_cast %34 : vector<1x8x256xf32> to vector<8x256xf32>
    %36 = vector.shape_cast %21 : vector<8x256xf32> to vector<1x8x256xf32>
    tpu.vector_store %arg5[%33, %c0_18, %c0_19], %36 {strides = array<i32>} : memref<2x8x256xf32, #tpu.memory_space<vmem>>, vector<1x8x256xf32>,
    %c1_i32 = arith.constant 1 : i32
    %37 = arith.cmpi eq, %arg0, %c1_i32 : i32
    %38 = arith.extui %37 : i1 to i32
    %c0_i32_20 = arith.constant 0 : i32
    %39 = arith.cmpi ne, %38, %c0_i32_20 : i32
    scf.if %39 {
      %c0_21 = arith.constant 0 : index
      %c0_22 = arith.constant 0 : index
      %40 = vector.load %arg6[%c0_21, %c0_22] : memref<8x1xf32, #tpu.memory_space<vmem>>, vector<8x1xf32>
      %cst_23 = arith.constant 0.001953125 : f32
      %41 = vector.broadcast %cst_23 : f32 to vector<8x1xf32>
      %42 = arith.mulf %40, %41 : vector<8x1xf32>
      %c0_24 = arith.constant 0 : index
      %c0_25 = arith.constant 0 : index
      %43 = vector.load %arg7[%c0_24, %c0_25] : memref<8x1xf32, #tpu.memory_space<vmem>>, vector<8x1xf32>
      %cst_26 = arith.constant 0.001953125 : f32
      %44 = vector.broadcast %cst_26 : f32 to vector<8x1xf32>
      %45 = arith.mulf %43, %44 : vector<8x1xf32>
      %46 = arith.mulf %42, %42 : vector<8x1xf32>
      %47 = arith.subf %45, %46 : vector<8x1xf32>
      %cst_27 = arith.constant 0.000000e+00 : f32
      %48 = vector.broadcast %cst_27 : f32 to vector<8x1xf32>
      %49 = arith.maximumf %47, %48 : vector<8x1xf32>
      %c0_28 = arith.constant 0 : index
      %c0_29 = arith.constant 0 : index
      %50 = vector.load %arg3[%c0_28, %c0_29] : memref<8x1xf32, #tpu.memory_space<vmem>>, vector<8x1xf32>
      %cst_30 = arith.constant 9.99999974E-6 : f32
      %51 = vector.broadcast %cst_30 : f32 to vector<8x1xf32>
      %52 = arith.addf %49, %51 : vector<8x1xf32>
      %53 = math.rsqrt %52 : vector<8x1xf32>
      %54 = arith.mulf %50, %53 : vector<8x1xf32>
      %c0_31 = arith.constant 0 : index
      %c0_32 = arith.constant 0 : index
      %55 = vector.load %arg4[%c0_31, %c0_32] : memref<8x1xf32, #tpu.memory_space<vmem>>, vector<8x1xf32>
      %56 = arith.mulf %42, %54 : vector<8x1xf32>
      %57 = arith.subf %55, %56 : vector<8x1xf32>
      %c0_33 = arith.constant 0 : index
      %c0_34 = arith.constant 0 : index
      %c0_35 = arith.constant 0 : index
      %58 = vector.load %arg5[%c0_33, %c0_34, %c0_35] : memref<2x8x256xf32, #tpu.memory_space<vmem>>, vector<2x8x256xf32>
      %59 = vector.shape_cast %54 : vector<8x1xf32> to vector<1x8x1xf32>
      %60 = vector.broadcast %59 : vector<1x8x1xf32> to vector<2x8x256xf32>
      %61 = arith.mulf %58, %60 : vector<2x8x256xf32>
      %62 = vector.shape_cast %57 : vector<8x1xf32> to vector<1x8x1xf32>
      %63 = vector.broadcast %62 : vector<1x8x1xf32> to vector<2x8x256xf32>
      %64 = arith.addf %61, %63 : vector<2x8x256xf32>
      %cst_36 = arith.constant 0.000000e+00 : f32
      %65 = vector.broadcast %cst_36 : f32 to vector<2x8x256xf32>
      %66 = arith.maximumf %64, %65 : vector<2x8x256xf32>
      %c0_37 = arith.constant 0 : index
      %c0_38 = arith.constant 0 : index
      %c0_39 = arith.constant 0 : index
      %67 = vector.load %arg5[%c0_37, %c0_38, %c0_39] : memref<2x8x256xf32, #tpu.memory_space<vmem>>, vector<2x8x256xf32>
      tpu.vector_store %arg5[%c0_37, %c0_38, %c0_39], %66 {strides = array<i32>} : memref<2x8x256xf32, #tpu.memory_space<vmem>>, vector<2x8x256xf32>,
    } else {
    }
    return
  }
  func.func @transform_0(%arg0: i32) -> (i32, i32, i32, i32) {
    %c0_i32 = arith.constant 0 : i32
    %c0_i32_0 = arith.constant 0 : i32
    %c0_i32_1 = arith.constant 0 : i32
    %c0_i32_2 = arith.constant 0 : i32
    return %arg0, %c0_i32, %c0_i32_0, %c0_i32_1 : i32, i32, i32, i32
  }
  func.func @transform_1(%arg0: i32) -> (i32, i32) {
    %c0_i32 = arith.constant 0 : i32
    %c0_i32_0 = arith.constant 0 : i32
    %c0_i32_1 = arith.constant 0 : i32
    return %c0_i32, %c0_i32_0 : i32, i32
  }
  func.func @transform_2(%arg0: i32) -> (i32, i32) {
    %c0_i32 = arith.constant 0 : i32
    %c0_i32_0 = arith.constant 0 : i32
    %c0_i32_1 = arith.constant 0 : i32
    return %c0_i32, %c0_i32_0 : i32, i32
  }
  func.func @transform_3(%arg0: i32) -> (i32, i32) {
    %c0_i32 = arith.constant 0 : i32
    %c0_i32_0 = arith.constant 0 : i32
    %c0_i32_1 = arith.constant 0 : i32
    return %c0_i32, %c0_i32_0 : i32, i32
  }
  func.func @transform_4(%arg0: i32) -> (i32, i32, i32) {
    %c0_i32 = arith.constant 0 : i32
    %c0_i32_0 = arith.constant 0 : i32
    %c0_i32_1 = arith.constant 0 : i32
    %c0_i32_2 = arith.constant 0 : i32
    return %c0_i32, %c0_i32_0, %c0_i32_1 : i32, i32, i32
  }
}

</mosaic_0001>

<llo_original>
// kernel: tpu_custom_call.1
$region0: #{tpu_custom_call.1}
  #allocation0 [shape = 'u32[]', space=smem, size = 0x4, offset = 0x4, fixed_abs, tag = 'smem constant byte address 0x4 - core index']
  #allocation1 [shape = 'u32[144,128]{1,0:T(1,128)}', space=vmem, size = 0x12000, scoped, tag = 'internal scratch']
  #allocation2 [shape = 'f32[8,1]{1,0:T(8,128)}', space=vmem, size = 0x1000, scoped, tag = 'scratch operand']
  #allocation3 [shape = 'f32[8,1]{1,0:T(8,128)}', space=vmem, size = 0x1000, scoped, tag = 'scratch operand']
  %s0 = inlined_call_operand.hbm [shape: f32[2,4,16,16], index: 0, kind: input, shape index: {}]
  %s1 = inlined_call_operand.vmem [shape: f32[8,36], index: 1, kind: input, shape index: {}]
  %s2 = inlined_call_operand.vmem [shape: f32[8,1], index: 2, kind: input, shape index: {}]
  %s3 = inlined_call_operand.vmem [shape: f32[8,1], index: 3, kind: input, shape index: {}]
  %s4 = inlined_call_operand.hbm [shape: f32[2,8,256], index: 4, kind: output, shape index: {}]
  %s5 = sld [smem:[#allocation0]]
  $region61: #{tpu_custom_call.1} parent=0
    _
  %s7 = ssub.s32 1, %s5
  %s8 = scalar_select 0, %s7, %s5
  $region1: #{tpu_custom_call.1} parent=0
    #allocation4 [shape = 'u8[65536]{0}', space=vmem, size = 0x10000, scoped, tag = 'input window, operand 0']
    #allocation5 [shape = 's32[2]{0}', space=sflag, size = 0x8, scoped, tag = 'scoped memory for tpu_custom_call.1']
    #allocation6 [shape = 's32[2]{0}', space=sflag, size = 0x8, scoped, tag = 'scoped memory for tpu_custom_call.1']
    #allocation7 [shape = 'u8[16384]{0}', space=vmem, size = 0x4000, scoped, tag = 'output window, operand 0, single buffered']
    %9 = vsyncpa [#allocation5], 0
    %s10 = scalar_lea.sflag [#allocation5], 1
    %11 = vsyncpa %s10, 0
    %12 = vsyncpa [#allocation6], 0
    loop: start=0, step=1, limit=4
    $region2: #{tpu_custom_call.1} parent=1 // loop_pre_header
      _
    $region3: #{tpu_custom_call.1} parent=1 // loop_header
      %s14 = sphi 0, %s18
      %p15 = scmp.ge.s32.totalorder %s14, 4
      %s24 = sphi 0, %s26
      %s27 = sphi 0, %s24
      %s28 = sphi 0, %s27
      %s44 = sphi 0, %s28
      %s48 = sphi 0, %s48
      %s50 = sphi 0, %s48
      %s51 = sphi 0, %s50
      %s65 = sphi 0, %s51
      %s69 = sphi 0, %s69
      %s71 = sphi 0, %s69
      %s72 = sphi 0, %s71
      %s86 = sphi 0, %s72
      %s90 = sphi 0, %s90
      %s92 = sphi 0, %s90
      %s93 = sphi 0, %s92
      %s107 = sphi 0, %s93
      %s111 = sphi 0, %s111
      %s113 = sphi 0, %s111
      %s114 = sphi 0, %s113
      %s128 = sphi 0, %s114
    $region4: #{tpu_custom_call.1} parent=1 // loop_header_branch
      %17 = sbr.rel (%p15) target = $region8
    $region5: #{tpu_custom_call.1} parent=1 // loop_body
      %s19 = ssub.s32 %s14, 1
      %s20 = ssub.s32 %s14, 2
      %s21 = sadd.s32 %s14, 1
      %s22 = ssub.s32 %s14, %s21
      %p23 = scmp.eq.s32.totalorder %s22, 0
      %s25 = sadd.s32 %s24, 1
      %s26 = scalar_select %p23, %s24, %s25
      %p29 = pneg %p23
      %p30 = scmp.eq.s32.totalorder %s14, 1
      %p31 = por %p29, %p30
      %p32 = scmp.ne.s32.totalorder %s24, %s27
      %p33 = scmp.eq.s32.totalorder %s14, 0
      %p34 = por %p32, %p33
      %p35 = scmp.ne.s32.totalorder %s24, %s27
      %p36 = scmp.eq.s32.totalorder %s19, 1
      %p37 = por %p35, %p36
      %p38 = scmp.ne.s32.totalorder %s27, %s28
      %p39 = scmp.eq.s32.totalorder %s19, 0
      %p40 = por %p38, %p39
      %p41 = scmp.ne.s32.totalorder %s27, %s28
      %p42 = scmp.eq.s32.totalorder %s20, 1
      %p43 = por %p41, %p42
      %p45 = scmp.ne.s32.totalorder %s28, %s44
      %p46 = scmp.eq.s32.totalorder %s20, 0
      %p47 = por %p45, %p46
      %s49 = sadd.s32 %s48, 1
      %p52 = scmp.eq.s32.totalorder %s14, 1
      %p53 = scmp.ne.s32.totalorder %s48, %s50
      %p54 = scmp.eq.s32.totalorder %s14, 0
      %p55 = por %p53, %p54
      %p56 = scmp.ne.s32.totalorder %s48, %s50
      %p57 = scmp.eq.s32.totalorder %s19, 1
      %p58 = por %p56, %p57
      %p59 = scmp.ne.s32.totalorder %s50, %s51
      %p60 = scmp.eq.s32.totalorder %s19, 0
      %p61 = por %p59, %p60
      %p62 = scmp.ne.s32.totalorder %s50, %s51
      %p63 = scmp.eq.s32.totalorder %s20, 1
      %p64 = por %p62, %p63
      %p66 = scmp.ne.s32.totalorder %s51, %s65
      %p67 = scmp.eq.s32.totalorder %s20, 0
      %p68 = por %p66, %p67
      %s70 = sadd.s32 %s69, 1
      %p73 = scmp.eq.s32.totalorder %s14, 1
      %p74 = scmp.ne.s32.totalorder %s69, %s71
      %p75 = scmp.eq.s32.totalorder %s14, 0
      %p76 = por %p74, %p75
      %p77 = scmp.ne.s32.totalorder %s69, %s71
      %p78 = scmp.eq.s32.totalorder %s19, 1
      %p79 = por %p77, %p78
      %p80 = scmp.ne.s32.totalorder %s71, %s72
      %p81 = scmp.eq.s32.totalorder %s19, 0
      %p82 = por %p80, %p81
      %p83 = scmp.ne.s32.totalorder %s71, %s72
      %p84 = scmp.eq.s32.totalorder %s20, 1
      %p85 = por %p83, %p84
      %p87 = scmp.ne.s32.totalorder %s72, %s86
      %p88 = scmp.eq.s32.totalorder %s20, 0
      %p89 = por %p87, %p88
      %s91 = sadd.s32 %s90, 1
      %p94 = scmp.eq.s32.totalorder %s14, 1
      %p95 = scmp.ne.s32.totalorder %s90, %s92
      %p96 = scmp.eq.s32.totalorder %s14, 0
      %p97 = por %p95, %p96
      %p98 = scmp.ne.s32.totalorder %s90, %s92
      %p99 = scmp.eq.s32.totalorder %s19, 1
      %p100 = por %p98, %p99
      %p101 = scmp.ne.s32.totalorder %s92, %s93
      %p102 = scmp.eq.s32.totalorder %s19, 0
      %p103 = por %p101, %p102
      %p104 = scmp.ne.s32.totalorder %s92, %s93
      %p105 = scmp.eq.s32.totalorder %s20, 1
      %p106 = por %p104, %p105
      %p108 = scmp.ne.s32.totalorder %s93, %s107
      %p109 = scmp.eq.s32.totalorder %s20, 0
      %p110 = por %p108, %p109
      %s112 = sadd.s32 %s111, 1
      %p115 = scmp.eq.s32.totalorder %s14, 1
      %p116 = scmp.ne.s32.totalorder %s111, %s113
      %p117 = scmp.eq.s32.totalorder %s14, 0
      %p118 = por %p116, %p117
      %p119 = scmp.ne.s32.totalorder %s111, %s113
      %p120 = scmp.eq.s32.totalorder %s19, 1
      %p121 = por %p119, %p120
      %p122 = scmp.ne.s32.totalorder %s113, %s114
      %p123 = scmp.eq.s32.totalorder %s19, 0
      %p124 = por %p122, %p123
      %p125 = scmp.ne.s32.totalorder %s113, %s114
      %p126 = scmp.eq.s32.totalorder %s20, 1
      %p127 = por %p125, %p126
      %p129 = scmp.ne.s32.totalorder %s114, %s128
      %p130 = scmp.eq.s32.totalorder %s20, 0
      %p131 = por %p129, %p130
      %p132 = scmp.le.s32.totalorder 1, %s14
      %p133 = scmp.lt.s32.totalorder %s14, 3
      %p134 = pnand %p132, %p133
      %p135 = pneg %p134
      // Predicated region
      $region9: #{tpu_custom_call.1} parent=5 // pred_check
        _
      $region10: #{tpu_custom_call.1} parent=5 // pred_check_branch
        %137 = sbr.rel (%p134) target = $region12
      $region11: #{tpu_custom_call.1} parent=5 // pred_region
        %s138 = ssub.s32 %s14, 1
        // Predicated region
        $region13: #{tpu_custom_call.1} parent=11 // pred_check
          %p139 = pneg %p61
        $region14: #{tpu_custom_call.1} parent=11 // pred_check_branch
          %141 = sbr.rel (%p139) target = $region16
        $region15: #{tpu_custom_call.1} parent=11 // pred_region
          _
        $region16: #{tpu_custom_call.1} parent=11 // pred_fallthru
          _
        // Predicated region
        $region17: #{tpu_custom_call.1} parent=11 // pred_check
          %p142 = pneg %p82
        $region18: #{tpu_custom_call.1} parent=11 // pred_check_branch
          %144 = sbr.rel (%p142) target = $region20
        $region19: #{tpu_custom_call.1} parent=11 // pred_region
          _
        $region20: #{tpu_custom_call.1} parent=11 // pred_fallthru
          _
        // Predicated region
        $region21: #{tpu_custom_call.1} parent=11 // pred_check
          %p145 = pneg %p103
        $region22: #{tpu_custom_call.1} parent=11 // pred_check_branch
          %147 = sbr.rel (%p145) target = $region24
        $region23: #{tpu_custom_call.1} parent=11 // pred_region
          _
        $region24: #{tpu_custom_call.1} parent=11 // pred_fallthru
          _
      $region12: #{tpu_custom_call.1} parent=5 // pred_fallthru
        _
      %p148 = scmp.lt.s32.totalorder %s14, 2
      // Predicated region
      $region25: #{tpu_custom_call.1} parent=5 // pred_check
        %p149 = pneg %p148
      $region26: #{tpu_custom_call.1} parent=5 // pred_check_branch
        %151 = sbr.rel (%p149) target = $region28
      $region27: #{tpu_custom_call.1} parent=5 // pred_region
        // Predicated region
        $region29: #{tpu_custom_call.1} parent=27 // pred_check
          %p152 = pneg %p34
        $region30: #{tpu_custom_call.1} parent=27 // pred_check_branch
          %154 = sbr.rel (%p152) target = $region32
        $region31: #{tpu_custom_call.1} parent=27 // pred_region
          %s155 = sand.u32 %s24, 1
          %s156 = scalar_lea.sflag [#allocation5], %s155
          %s157 = sand.u32 %s24, 1
          %s158 = smul.addr %s157, 64
          %s159 = scalar_lea.vmem [#allocation4], %s158
          %s161 = ssub.s32 1024, 1024
          %162 = vsyncadd %s156, %s161
          %s163 = smul.addr %s14, 8
          %s164 = smul.addr %s163, 128
          %s165 = scalar_lea.hbm %s0, %s164
          %s166 = sshll.u32 %s159, 4
          %s167 = int_to_ptr.vmem [resolvable:$true] %s166
          %172 = dma.hbm_to_vmem [thread:$0]  %s165, 1024, %s167, %s156, 128, 128, 8
        $region32: #{tpu_custom_call.1} parent=27 // pred_fallthru
          _
      $region28: #{tpu_custom_call.1} parent=5 // pred_fallthru
        _
      %p173 = scmp.le.s32.totalorder 1, %s14
      %p174 = scmp.lt.s32.totalorder %s14, 3
      %p175 = pnand %p173, %p174
      %p176 = pneg %p175
      // Predicated region
      $region33: #{tpu_custom_call.1} parent=5 // pred_check
        _
      $region34: #{tpu_custom_call.1} parent=5 // pred_check_branch
        %178 = sbr.rel (%p175) target = $region36
      $region35: #{tpu_custom_call.1} parent=5 // pred_region
        %s179 = ssub.s32 %s14, 1
        %s180 = sand.u32 %s27, 1
        %s181 = scalar_lea.sflag [#allocation5], %s180
        %s182 = sand.u32 %s27, 1
        %s183 = smul.addr %s182, 64
        %s184 = scalar_lea.vmem [#allocation4], %s183
        // Predicated region
        $region37: #{tpu_custom_call.1} parent=35 // pred_check
          %p185 = pneg %p40
        $region38: #{tpu_custom_call.1} parent=35 // pred_check_branch
          %187 = sbr.rel (%p185) target = $region40
        $region39: #{tpu_custom_call.1} parent=35 // pred_region
          %188 = dma.done %s181, 1024
        $region40: #{tpu_custom_call.1} parent=35 // pred_fallthru
          _
        %s189 = sand.u32 %s27, 1
        %s190 = scalar_lea.sflag [#allocation5], %s189
        %s191 = sand.u32 %s27, 1
        %s192 = smul.addr %s191, 64
        %s193 = scalar_lea.vmem [#allocation4], %s192
        %p194 = pneg %p40
        %p195 = pneg %p37
        %p196 = pneg %p61
        %p197 = pneg %p58
        %p198 = pneg %p82
        %p199 = pneg %p79
        %p200 = pneg %p103
        %p201 = pneg %p100
        %p202 = pneg %p124
        %p203 = pneg %p121
        %p204 = scmp.eq.s32.totalorder %s19, 0
        // Predicated region
        $region41: #{tpu_custom_call.1} parent=35 // pred_check
          %p205 = pneg %p204
        $region42: #{tpu_custom_call.1} parent=35 // pred_check_branch
          %207 = sbr.rel (%p205) target = $region44
        $region43: #{tpu_custom_call.1} parent=35 // pred_region
          %vm208 = vcmask 7168
          %209 = vst.msk [vmem:[#allocation2] sm:$0xff] %vm208, 0.0
          %210 = vst.msk [vmem:[#allocation3] sm:$0xff] %vm208, 0.0
        $region44: #{tpu_custom_call.1} parent=35 // pred_fallthru
          _
        %v211 = vld [vmem:[%s184] sm:$0xff]
        %v212 = vld [vmem:[%s184 + $0x8] sm:$0xff]
        %v213 = vld [vmem:[%s184 + $0x10] sm:$0xff]
        %v214 = vld [vmem:[%s184 + $0x18] sm:$0xff]
        %v215 = vld [vmem:[%s184 + $0x20] sm:$0xff]
        %v216 = vld [vmem:[%s184 + $0x28] sm:$0xff]
        %v217 = vld [vmem:[%s184 + $0x30] sm:$0xff]
        %v218 = vld [vmem:[%s184 + $0x38] sm:$0xff]
        %vm227 = vcmask 1040384
        %v228 = vrot.slane %v211, 7
        %v229 = vrot.slane %v212, 7
        %v230 = vsel %vm227, %v228, %v229
        %v231 = vrot.slane %v213, 7
        %v232 = vrot.slane %v214, 7
        %v233 = vsel %vm227, %v231, %v232
        %v234 = vrot.slane %v215, 7
        %v235 = vrot.slane %v216, 7
        %v236 = vsel %vm227, %v234, %v235
        %v237 = vrot.slane %v217, 7
        %v238 = vrot.slane %v218, 7
        %v239 = vsel %vm227, %v237, %v238
        %v248 = vsel %vm227, 0.0, %v228
        %v249 = vsel %vm227, 0.0, %v231
        %v250 = vsel %vm227, 0.0, %v234
        %v251 = vsel %vm227, 0.0, %v237
        %v252 = vsel %vm227, %v229, 0.0
        %v253 = vsel %vm227, %v232, 0.0
        %v254 = vsel %vm227, %v235, 0.0
        %v255 = vsel %vm227, %v238, 0.0
        %264 = vrot.lane.b32.xlu0 %v248, 1
        %v265 = vpop.permute.xlu0 %264
        %266 = vrot.lane.b32.xlu0 %v230, 1
        %v267 = vpop.permute.xlu0 %266
        %268 = vrot.lane.b32.xlu0 %v252, 1
        %v269 = vpop.permute.xlu0 %268
        %270 = vrot.lane.b32.xlu0 %v249, 1
        %v271 = vpop.permute.xlu0 %270
        %272 = vrot.lane.b32.xlu0 %v233, 1
        %v273 = vpop.permute.xlu0 %272
        %274 = vrot.lane.b32.xlu0 %v253, 1
        %v275 = vpop.permute.xlu0 %274
        %276 = vrot.lane.b32.xlu0 %v250, 1
        %v277 = vpop.permute.xlu0 %276
        %278 = vrot.lane.b32.xlu0 %v236, 1
        %v279 = vpop.permute.xlu0 %278
        %280 = vrot.lane.b32.xlu0 %v254, 1
        %v281 = vpop.permute.xlu0 %280
        %282 = vrot.lane.b32.xlu0 %v251, 1
        %v283 = vpop.permute.xlu0 %282
        %284 = vrot.lane.b32.xlu0 %v239, 1
        %v285 = vpop.permute.xlu0 %284
        %286 = vrot.lane.b32.xlu0 %v255, 1
        %v287 = vpop.permute.xlu0 %286
        %vm300 = vcmask 7168
        %v301 = vsel %vm300, 0.0, %v265
        %v302 = vsel %vm300, 0.0, %v267
        %v303 = vsel %vm300, 0.0, %v269
        %v304 = vsel %vm300, 0.0, %v271
        %v305 = vsel %vm300, 0.0, %v273
        %v306 = vsel %vm300, 0.0, %v275
        %v307 = vsel %vm300, 0.0, %v277
        %v308 = vsel %vm300, 0.0, %v279
        %v309 = vsel %vm300, 0.0, %v281
        %v310 = vsel %vm300, 0.0, %v283
        %v311 = vsel %vm300, 0.0, %v285
        %v312 = vsel %vm300, 0.0, %v287
        %vm313 = vcmask 138240
        %v314 = vsel %vm313, %v301, 0.0
        %v315 = vsel %vm313, %v302, 0.0
        %v316 = vsel %vm313, %v303, 0.0
        %v317 = vsel %vm313, %v304, 0.0
        %v318 = vsel %vm313, %v305, 0.0
        %v319 = vsel %vm313, %v306, 0.0
        %v320 = vsel %vm313, %v307, 0.0
        %v321 = vsel %vm313, %v308, 0.0
        %v322 = vsel %vm313, %v309, 0.0
        %v323 = vsel %vm313, %v310, 0.0
        %v324 = vsel %vm313, %v311, 0.0
        %v325 = vsel %vm313, %v312, 0.0
        %334 = vrot.lane.b32.xlu0 %v314, 127
        %v335 = vpop.permute.xlu0 %334
        %336 = vrot.lane.b32.xlu0 %v315, 127
        %v337 = vpop.permute.xlu0 %336
        %338 = vrot.lane.b32.xlu0 %v317, 127
        %v339 = vpop.permute.xlu0 %338
        %340 = vrot.lane.b32.xlu0 %v318, 127
        %v341 = vpop.permute.xlu0 %340
        %342 = vrot.lane.b32.xlu0 %v320, 127
        %v343 = vpop.permute.xlu0 %342
        %344 = vrot.lane.b32.xlu0 %v321, 127
        %v345 = vpop.permute.xlu0 %344
        %346 = vrot.lane.b32.xlu0 %v323, 127
        %v347 = vpop.permute.xlu0 %346
        %348 = vrot.lane.b32.xlu0 %v324, 127
        %v349 = vpop.permute.xlu0 %348
        %358 = vrot.lane.b32.xlu0 %v314, 126
        %v359 = vpop.permute.xlu0 %358
        %360 = vrot.lane.b32.xlu0 %v315, 126
        %v361 = vpop.permute.xlu0 %360
        %362 = vrot.lane.b32.xlu0 %v317, 126
        %v363 = vpop.permute.xlu0 %362
        %364 = vrot.lane.b32.xlu0 %v318, 126
        %v365 = vpop.permute.xlu0 %364
        %366 = vrot.lane.b32.xlu0 %v320, 126
        %v367 = vpop.permute.xlu0 %366
        %368 = vrot.lane.b32.xlu0 %v321, 126
        %v369 = vpop.permute.xlu0 %368
        %370 = vrot.lane.b32.xlu0 %v323, 126
        %v371 = vpop.permute.xlu0 %370
        %372 = vrot.lane.b32.xlu0 %v324, 126
        %v373 = vpop.permute.xlu0 %372
        %vm386 = vcmask 1046528
        %v387 = vrot.slane %v314, 1
        %v388 = vrot.slane %v315, 1
        %v389 = vsel %vm386, %v387, %v388
        %v390 = vrot.slane %v316, 1
        %v391 = vsel %vm386, %v388, %v390
        %v392 = vrot.slane %v317, 1
        %v393 = vrot.slane %v318, 1
        %v394 = vsel %vm386, %v392, %v393
        %v395 = vrot.slane %v319, 1
        %v396 = vsel %vm386, %v393, %v395
        %v397 = vrot.slane %v320, 1
        %v398 = vrot.slane %v321, 1
        %v399 = vsel %vm386, %v397, %v398
        %v400 = vrot.slane %v322, 1
        %v401 = vsel %vm386, %v398, %v400
        %v402 = vrot.slane %v323, 1
        %v403 = vrot.slane %v324, 1
        %v404 = vsel %vm386, %v402, %v403
        %v405 = vrot.slane %v325, 1
        %v406 = vsel %vm386, %v403, %v405
        %415 = vrot.lane.b32.xlu0 %v389, 127
        %v416 = vpop.permute.xlu0 %415
        %417 = vrot.lane.b32.xlu0 %v391, 127
        %v418 = vpop.permute.xlu0 %417
        %419 = vrot.lane.b32.xlu0 %v394, 127
        %v420 = vpop.permute.xlu0 %419
        %421 = vrot.lane.b32.xlu0 %v396, 127
        %v422 = vpop.permute.xlu0 %421
        %423 = vrot.lane.b32.xlu0 %v399, 127
        %v424 = vpop.permute.xlu0 %423
        %425 = vrot.lane.b32.xlu0 %v401, 127
        %v426 = vpop.permute.xlu0 %425
        %427 = vrot.lane.b32.xlu0 %v404, 127
        %v428 = vpop.permute.xlu0 %427
        %429 = vrot.lane.b32.xlu0 %v406, 127
        %v430 = vpop.permute.xlu0 %429
        %439 = vrot.lane.b32.xlu0 %v389, 126
        %v440 = vpop.permute.xlu0 %439
        %441 = vrot.lane.b32.xlu0 %v391, 126
        %v442 = vpop.permute.xlu0 %441
        %443 = vrot.lane.b32.xlu0 %v394, 126
        %v444 = vpop.permute.xlu0 %443
        %445 = vrot.lane.b32.xlu0 %v396, 126
        %v446 = vpop.permute.xlu0 %445
        %447 = vrot.lane.b32.xlu0 %v399, 126
        %v448 = vpop.permute.xlu0 %447
        %449 = vrot.lane.b32.xlu0 %v401, 126
        %v450 = vpop.permute.xlu0 %449
        %451 = vrot.lane.b32.xlu0 %v404, 126
        %v452 = vpop.permute.xlu0 %451
        %453 = vrot.lane.b32.xlu0 %v406, 126
        %v454 = vpop.permute.xlu0 %453
        %vm463 = vcmask 1045504
        %v464 = vrot.slane %v314, 2
        %v465 = vrot.slane %v315, 2
        %v466 = vsel %vm463, %v464, %v465
        %v467 = vrot.slane %v316, 2
        %v468 = vsel %vm463, %v465, %v467
        %v469 = vrot.slane %v317, 2
        %v470 = vrot.slane %v318, 2
        %v471 = vsel %vm463, %v469, %v470
        %v472 = vrot.slane %v319, 2
        %v473 = vsel %vm463, %v470, %v472
        %v474 = vrot.slane %v320, 2
        %v475 = vrot.slane %v321, 2
        %v476 = vsel %vm463, %v474, %v475
        %v477 = vrot.slane %v322, 2
        %v478 = vsel %vm463, %v475, %v477
        %v479 = vrot.slane %v323, 2
        %v480 = vrot.slane %v324, 2
        %v481 = vsel %vm463, %v479, %v480
        %v482 = vrot.slane %v325, 2
        %v483 = vsel %vm463, %v480, %v482
        %492 = vrot.lane.b32.xlu0 %v466, 127
        %v493 = vpop.permute.xlu0 %492
        %494 = vrot.lane.b32.xlu0 %v468, 127
        %v495 = vpop.permute.xlu0 %494
        %496 = vrot.lane.b32.xlu0 %v471, 127
        %v497 = vpop.permute.xlu0 %496
        %498 = vrot.lane.b32.xlu0 %v473, 127
        %v499 = vpop.permute.xlu0 %498
        %500 = vrot.lane.b32.xlu0 %v476, 127
        %v501 = vpop.permute.xlu0 %500
        %502 = vrot.lane.b32.xlu0 %v478, 127
        %v503 = vpop.permute.xlu0 %502
        %504 = vrot.lane.b32.xlu0 %v481, 127
        %v505 = vpop.permute.xlu0 %504
        %506 = vrot.lane.b32.xlu0 %v483, 127
        %v507 = vpop.permute.xlu0 %506
        %516 = vrot.lane.b32.xlu0 %v466, 126
        %v517 = vpop.permute.xlu0 %516
        %518 = vrot.lane.b32.xlu0 %v468, 126
        %v519 = vpop.permute.xlu0 %518
        %520 = vrot.lane.b32.xlu0 %v471, 126
        %v521 = vpop.permute.xlu0 %520
        %522 = vrot.lane.b32.xlu0 %v473, 126
        %v523 = vpop.permute.xlu0 %522
        %524 = vrot.lane.b32.xlu0 %v476, 126
        %v525 = vpop.permute.xlu0 %524
        %526 = vrot.lane.b32.xlu0 %v478, 126
        %v527 = vpop.permute.xlu0 %526
        %528 = vrot.lane.b32.xlu0 %v481, 126
        %v529 = vpop.permute.xlu0 %528
        %530 = vrot.lane.b32.xlu0 %v483, 126
        %v531 = vpop.permute.xlu0 %530
        %v540 = vcombine.low %v314, %v320
        %v541 = vcombine.high %v314, %v320
        %v543 = vunpack.c.l.s4 1983009808
        %v544 = vunpack.c.0.s8 %v543
        %v545 = vlaneseq
        %v546 = vshrl.u32 %v545, 7
        %v547 = vsub.s32 %v544, %v546
        %v548 = vrot.slane %v540, %v547
        %v550 = vunpack.c.l.s4 1983009808
        %v551 = vunpack.c.0.s8 %v550
        %v552 = vlaneseq
        %v553 = vshrl.u32 %v552, 7
        %v554 = vsub.s32 %v551, %v553
        %v555 = vrot.slane %v541, %v554
        %v556 = vcombine.low %v317, %v323
        %v557 = vcombine.high %v317, %v323
        %v559 = vunpack.c.l.s4 1983009808
        %v560 = vunpack.c.0.s8 %v559
        %v561 = vlaneseq
        %v562 = vshrl.u32 %v561, 7
        %v563 = vsub.s32 %v560, %v562
        %v564 = vrot.slane %v556, %v563
        %v566 = vunpack.c.l.s4 1983009808
        %v567 = vunpack.c.0.s8 %v566
        %v568 = vlaneseq
        %v569 = vshrl.u32 %v568, 7
        %v570 = vsub.s32 %v567, %v569
        %v571 = vrot.slane %v557, %v570
        %v572 = vcombine.low %v335, %v343
        %v573 = vcombine.high %v335, %v343
        %v575 = vunpack.c.l.s4 1983009808
        %v576 = vunpack.c.0.s8 %v575
        %v577 = vlaneseq
        %v578 = vshrl.u32 %v577, 7
        %v579 = vsub.s32 %v576, %v578
        %v580 = vrot.slane %v572, %v579
        %v582 = vunpack.c.l.s4 1983009808
        %v583 = vunpack.c.0.s8 %v582
        %v584 = vlaneseq
        %v585 = vshrl.u32 %v584, 7
        %v586 = vsub.s32 %v583, %v585
        %v587 = vrot.slane %v573, %v586
        %v588 = vcombine.low %v339, %v347
        %v589 = vcombine.high %v339, %v347
        %v591 = vunpack.c.l.s4 1983009808
        %v592 = vunpack.c.0.s8 %v591
        %v593 = vlaneseq
        %v594 = vshrl.u32 %v593, 7
        %v595 = vsub.s32 %v592, %v594
        %v596 = vrot.slane %v588, %v595
        %v598 = vunpack.c.l.s4 1983009808
        %v599 = vunpack.c.0.s8 %v598
        %v600 = vlaneseq
        %v601 = vshrl.u32 %v600, 7
        %v602 = vsub.s32 %v599, %v601
        %v603 = vrot.slane %v589, %v602
        %v604 = vcombine.low %v548, %v564
        %v605 = vcombine.high %v548, %v564
        %v607 = vunpack.c.l.s4 1934713408
        %v608 = vunpack.c.0.s8 %v607
        %v609 = vlaneseq
        %v610 = vshrl.u32 %v609, 7
        %v611 = vsub.s32 %v608, %v610
        %v612 = vrot.slane %v604, %v611
        %v614 = vunpack.c.l.s4 1934713408
        %v615 = vunpack.c.0.s8 %v614
        %v616 = vlaneseq
        %v617 = vshrl.u32 %v616, 7
        %v618 = vsub.s32 %v615, %v617
        %v619 = vrot.slane %v605, %v618
        %v620 = vcombine.low %v555, %v571
        %v621 = vcombine.high %v555, %v571
        %v623 = vunpack.c.l.s4 1934713408
        %v624 = vunpack.c.0.s8 %v623
        %v625 = vlaneseq
        %v626 = vshrl.u32 %v625, 7
        %v627 = vsub.s32 %v624, %v626
        %v628 = vrot.slane %v620, %v627
        %v630 = vunpack.c.l.s4 1934713408
        %v631 = vunpack.c.0.s8 %v630
        %v632 = vlaneseq
        %v633 = vshrl.u32 %v632, 7
        %v634 = vsub.s32 %v631, %v633
        %v635 = vrot.slane %v621, %v634
        %v636 = vcombine.low %v580, %v596
        %v637 = vcombine.high %v580, %v596
        %v639 = vunpack.c.l.s4 1934713408
        %v640 = vunpack.c.0.s8 %v639
        %v641 = vlaneseq
        %v642 = vshrl.u32 %v641, 7
        %v643 = vsub.s32 %v640, %v642
        %v644 = vrot.slane %v636, %v643
        %v646 = vunpack.c.l.s4 1934713408
        %v647 = vunpack.c.0.s8 %v646
        %v648 = vlaneseq
        %v649 = vshrl.u32 %v648, 7
        %v650 = vsub.s32 %v647, %v649
        %v651 = vrot.slane %v637, %v650
        %v652 = vcombine.low %v587, %v603
        %v653 = vcombine.high %v587, %v603
        %v655 = vunpack.c.l.s4 1934713408
        %v656 = vunpack.c.0.s8 %v655
        %v657 = vlaneseq
        %v658 = vshrl.u32 %v657, 7
        %v659 = vsub.s32 %v656, %v658
        %v660 = vrot.slane %v652, %v659
        %v662 = vunpack.c.l.s4 1934713408
        %v663 = vunpack.c.0.s8 %v662
        %v664 = vlaneseq
        %v665 = vshrl.u32 %v664, 7
        %v666 = vsub.s32 %v663, %v665
        %v667 = vrot.slane %v653, %v666
        %v668 = vcombine.low %v612, %v644
        %v669 = vcombine.high %v612, %v644
        %v670 = vcombine.low %v619, %v651
        %v671 = vcombine.high %v619, %v651
        %v672 = vcombine.low %v628, %v660
        %v673 = vcombine.high %v628, %v660
        %v674 = vcombine.low %v635, %v667
        %v675 = vcombine.high %v635, %v667
        %v676 = vcombine.low %v359, %v367
        %v677 = vcombine.high %v359, %v367
        %v679 = vunpack.c.l.s4 1983009808
        %v680 = vunpack.c.0.s8 %v679
        %v681 = vlaneseq
        %v682 = vshrl.u32 %v681, 7
        %v683 = vsub.s32 %v680, %v682
        %v684 = vrot.slane %v676, %v683
        %v686 = vunpack.c.l.s4 1983009808
        %v687 = vunpack.c.0.s8 %v686
        %v688 = vlaneseq
        %v689 = vshrl.u32 %v688, 7
        %v690 = vsub.s32 %v687, %v689
        %v691 = vrot.slane %v677, %v690
        %v692 = vcombine.low %v363, %v371
        %v693 = vcombine.high %v363, %v371
        %v695 = vunpack.c.l.s4 1983009808
        %v696 = vunpack.c.0.s8 %v695
        %v697 = vlaneseq
        %v698 = vshrl.u32 %v697, 7
        %v699 = vsub.s32 %v696, %v698
        %v700 = vrot.slane %v692, %v699
        %v702 = vunpack.c.l.s4 1983009808
        %v703 = vunpack.c.0.s8 %v702
        %v704 = vlaneseq
        %v705 = vshrl.u32 %v704, 7
        %v706 = vsub.s32 %v703, %v705
        %v707 = vrot.slane %v693, %v706
        %v708 = vcombine.low %v389, %v399
        %v709 = vcombine.high %v389, %v399
        %v711 = vunpack.c.l.s4 1983009808
        %v712 = vunpack.c.0.s8 %v711
        %v713 = vlaneseq
        %v714 = vshrl.u32 %v713, 7
        %v715 = vsub.s32 %v712, %v714
        %v716 = vrot.slane %v708, %v715
        %v718 = vunpack.c.l.s4 1983009808
        %v719 = vunpack.c.0.s8 %v718
        %v720 = vlaneseq
        %v721 = vshrl.u32 %v720, 7
        %v722 = vsub.s32 %v719, %v721
        %v723 = vrot.slane %v709, %v722
        %v724 = vcombine.low %v394, %v404
        %v725 = vcombine.high %v394, %v404
        %v727 = vunpack.c.l.s4 1983009808
        %v728 = vunpack.c.0.s8 %v727
        %v729 = vlaneseq
        %v730 = vshrl.u32 %v729, 7
        %v731 = vsub.s32 %v728, %v730
        %v732 = vrot.slane %v724, %v731
        %v734 = vunpack.c.l.s4 1983009808
        %v735 = vunpack.c.0.s8 %v734
        %v736 = vlaneseq
        %v737 = vshrl.u32 %v736, 7
        %v738 = vsub.s32 %v735, %v737
        %v739 = vrot.slane %v725, %v738
        %v740 = vcombine.low %v684, %v700
        %v741 = vcombine.high %v684, %v700
        %v743 = vunpack.c.l.s4 1934713408
        %v744 = vunpack.c.0.s8 %v743
        %v745 = vlaneseq
        %v746 = vshrl.u32 %v745, 7
        %v747 = vsub.s32 %v744, %v746
        %v748 = vrot.slane %v740, %v747
        %v750 = vunpack.c.l.s4 1934713408
        %v751 = vunpack.c.0.s8 %v750
        %v752 = vlaneseq
        %v753 = vshrl.u32 %v752, 7
        %v754 = vsub.s32 %v751, %v753
        %v755 = vrot.slane %v741, %v754
        %v756 = vcombine.low %v691, %v707
        %v757 = vcombine.high %v691, %v707
        %v759 = vunpack.c.l.s4 1934713408
        %v760 = vunpack.c.0.s8 %v759
        %v761 = vlaneseq
        %v762 = vshrl.u32 %v761, 7
        %v763 = vsub.s32 %v760, %v762
        %v764 = vrot.slane %v756, %v763
        %v766 = vunpack.c.l.s4 1934713408
        %v767 = vunpack.c.0.s8 %v766
        %v768 = vlaneseq
        %v769 = vshrl.u32 %v768, 7
        %v770 = vsub.s32 %v767, %v769
        %v771 = vrot.slane %v757, %v770
        %v772 = vcombine.low %v716, %v732
        %v773 = vcombine.high %v716, %v732
        %v775 = vunpack.c.l.s4 1934713408
        %v776 = vunpack.c.0.s8 %v775
        %v777 = vlaneseq
        %v778 = vshrl.u32 %v777, 7
        %v779 = vsub.s32 %v776, %v778
        %v780 = vrot.slane %v772, %v779
        %v782 = vunpack.c.l.s4 1934713408
        %v783 = vunpack.c.0.s8 %v782
        %v784 = vlaneseq
        %v785 = vshrl.u32 %v784, 7
        %v786 = vsub.s32 %v783, %v785
        %v787 = vrot.slane %v773, %v786
        %v788 = vcombine.low %v723, %v739
        %v789 = vcombine.high %v723, %v739
        %v791 = vunpack.c.l.s4 1934713408
        %v792 = vunpack.c.0.s8 %v791
        %v793 = vlaneseq
        %v794 = vshrl.u32 %v793, 7
        %v795 = vsub.s32 %v792, %v794
        %v796 = vrot.slane %v788, %v795
        %v798 = vunpack.c.l.s4 1934713408
        %v799 = vunpack.c.0.s8 %v798
        %v800 = vlaneseq
        %v801 = vshrl.u32 %v800, 7
        %v802 = vsub.s32 %v799, %v801
        %v803 = vrot.slane %v789, %v802
        %v804 = vcombine.low %v748, %v780
        %v805 = vcombine.high %v748, %v780
        %v806 = vcombine.low %v755, %v787
        %v807 = vcombine.high %v755, %v787
        %v808 = vcombine.low %v764, %v796
        %v809 = vcombine.high %v764, %v796
        %v810 = vcombine.low %v771, %v803
        %v811 = vcombine.high %v771, %v803
        %v812 = vcombine.low %v416, %v424
        %v813 = vcombine.high %v416, %v424
        %v815 = vunpack.c.l.s4 1983009808
        %v816 = vunpack.c.0.s8 %v815
        %v817 = vlaneseq
        %v818 = vshrl.u32 %v817, 7
        %v819 = vsub.s32 %v816, %v818
        %v820 = vrot.slane %v812, %v819
        %v822 = vunpack.c.l.s4 1983009808
        %v823 = vunpack.c.0.s8 %v822
        %v824 = vlaneseq
        %v825 = vshrl.u32 %v824, 7
        %v826 = vsub.s32 %v823, %v825
        %v827 = vrot.slane %v813, %v826
        %v828 = vcombine.low %v420, %v428
        %v829 = vcombine.high %v420, %v428
        %v831 = vunpack.c.l.s4 1983009808
        %v832 = vunpack.c.0.s8 %v831
        %v833 = vlaneseq
        %v834 = vshrl.u32 %v833, 7
        %v835 = vsub.s32 %v832, %v834
        %v836 = vrot.slane %v828, %v835
        %v838 = vunpack.c.l.s4 1983009808
        %v839 = vunpack.c.0.s8 %v838
        %v840 = vlaneseq
        %v841 = vshrl.u32 %v840, 7
        %v842 = vsub.s32 %v839, %v841
        %v843 = vrot.slane %v829, %v842
        %v844 = vcombine.low %v440, %v448
        %v845 = vcombine.high %v440, %v448
        %v847 = vunpack.c.l.s4 1983009808
        %v848 = vunpack.c.0.s8 %v847
        %v849 = vlaneseq
        %v850 = vshrl.u32 %v849, 7
        %v851 = vsub.s32 %v848, %v850
        %v852 = vrot.slane %v844, %v851
        %v854 = vunpack.c.l.s4 1983009808
        %v855 = vunpack.c.0.s8 %v854
        %v856 = vlaneseq
        %v857 = vshrl.u32 %v856, 7
        %v858 = vsub.s32 %v855, %v857
        %v859 = vrot.slane %v845, %v858
        %v860 = vcombine.low %v444, %v452
        %v861 = vcombine.high %v444, %v452
        %v863 = vunpack.c.l.s4 1983009808
        %v864 = vunpack.c.0.s8 %v863
        %v865 = vlaneseq
        %v866 = vshrl.u32 %v865, 7
        %v867 = vsub.s32 %v864, %v866
        %v868 = vrot.slane %v860, %v867
        %v870 = vunpack.c.l.s4 1983009808
        %v871 = vunpack.c.0.s8 %v870
        %v872 = vlaneseq
        %v873 = vshrl.u32 %v872, 7
        %v874 = vsub.s32 %v871, %v873
        %v875 = vrot.slane %v861, %v874
        %v876 = vcombine.low %v820, %v836
        %v877 = vcombine.high %v820, %v836
        %v879 = vunpack.c.l.s4 1934713408
        %v880 = vunpack.c.0.s8 %v879
        %v881 = vlaneseq
        %v882 = vshrl.u32 %v881, 7
        %v883 = vsub.s32 %v880, %v882
        %v884 = vrot.slane %v876, %v883
        %v886 = vunpack.c.l.s4 1934713408
        %v887 = vunpack.c.0.s8 %v886
        %v888 = vlaneseq
        %v889 = vshrl.u32 %v888, 7
        %v890 = vsub.s32 %v887, %v889
        %v891 = vrot.slane %v877, %v890
        %v892 = vcombine.low %v827, %v843
        %v893 = vcombine.high %v827, %v843
        %v895 = vunpack.c.l.s4 1934713408
        %v896 = vunpack.c.0.s8 %v895
        %v897 = vlaneseq
        %v898 = vshrl.u32 %v897, 7
        %v899 = vsub.s32 %v896, %v898
        %v900 = vrot.slane %v892, %v899
        %v902 = vunpack.c.l.s4 1934713408
        %v903 = vunpack.c.0.s8 %v902
        %v904 = vlaneseq
        %v905 = vshrl.u32 %v904, 7
        %v906 = vsub.s32 %v903, %v905
        %v907 = vrot.slane %v893, %v906
        %v908 = vcombine.low %v852, %v868
        %v909 = vcombine.high %v852, %v868
        %v911 = vunpack.c.l.s4 1934713408
        %v912 = vunpack.c.0.s8 %v911
        %v913 = vlaneseq
        %v914 = vshrl.u32 %v913, 7
        %v915 = vsub.s32 %v912, %v914
        %v916 = vrot.slane %v908, %v915
        %v918 = vunpack.c.l.s4 1934713408
        %v919 = vunpack.c.0.s8 %v918
        %v920 = vlaneseq
        %v921 = vshrl.u32 %v920, 7
        %v922 = vsub.s32 %v919, %v921
        %v923 = vrot.slane %v909, %v922
        %v924 = vcombine.low %v859, %v875
        %v925 = vcombine.high %v859, %v875
        %v927 = vunpack.c.l.s4 1934713408
        %v928 = vunpack.c.0.s8 %v927
        %v929 = vlaneseq
        %v930 = vshrl.u32 %v929, 7
        %v931 = vsub.s32 %v928, %v930
        %v932 = vrot.slane %v924, %v931
        %v934 = vunpack.c.l.s4 1934713408
        %v935 = vunpack.c.0.s8 %v934
        %v936 = vlaneseq
        %v937 = vshrl.u32 %v936, 7
        %v938 = vsub.s32 %v935, %v937
        %v939 = vrot.slane %v925, %v938
        %v940 = vcombine.low %v884, %v916
        %v941 = vcombine.high %v884, %v916
        %v942 = vcombine.low %v891, %v923
        %v943 = vcombine.high %v891, %v923
        %v944 = vcombine.low %v900, %v932
        %v945 = vcombine.high %v900, %v932
        %v946 = vcombine.low %v907, %v939
        %v947 = vcombine.high %v907, %v939
        %v948 = vcombine.low %v466, %v476
        %v949 = vcombine.high %v466, %v476
        %v951 = vunpack.c.l.s4 1983009808
        %v952 = vunpack.c.0.s8 %v951
        %v953 = vlaneseq
        %v954 = vshrl.u32 %v953, 7
        %v955 = vsub.s32 %v952, %v954
        %v956 = vrot.slane %v948, %v955
        %v958 = vunpack.c.l.s4 1983009808
        %v959 = vunpack.c.0.s8 %v958
        %v960 = vlaneseq
        %v961 = vshrl.u32 %v960, 7
        %v962 = vsub.s32 %v959, %v961
        %v963 = vrot.slane %v949, %v962
        %v964 = vcombine.low %v471, %v481
        %v965 = vcombine.high %v471, %v481
        %v967 = vunpack.c.l.s4 1983009808
        %v968 = vunpack.c.0.s8 %v967
        %v969 = vlaneseq
        %v970 = vshrl.u32 %v969, 7
        %v971 = vsub.s32 %v968, %v970
        %v972 = vrot.slane %v964, %v971
        %v974 = vunpack.c.l.s4 1983009808
        %v975 = vunpack.c.0.s8 %v974
        %v976 = vlaneseq
        %v977 = vshrl.u32 %v976, 7
        %v978 = vsub.s32 %v975, %v977
        %v979 = vrot.slane %v965, %v978
        %v980 = vcombine.low %v493, %v501
        %v981 = vcombine.high %v493, %v501
        %v983 = vunpack.c.l.s4 1983009808
        %v984 = vunpack.c.0.s8 %v983
        %v985 = vlaneseq
        %v986 = vshrl.u32 %v985, 7
        %v987 = vsub.s32 %v984, %v986
        %v988 = vrot.slane %v980, %v987
        %v990 = vunpack.c.l.s4 1983009808
        %v991 = vunpack.c.0.s8 %v990
        %v992 = vlaneseq
        %v993 = vshrl.u32 %v992, 7
        %v994 = vsub.s32 %v991, %v993
        %v995 = vrot.slane %v981, %v994
        %v996 = vcombine.low %v497, %v505
        %v997 = vcombine.high %v497, %v505
        %v999 = vunpack.c.l.s4 1983009808
        %v1000 = vunpack.c.0.s8 %v999
        %v1001 = vlaneseq
        %v1002 = vshrl.u32 %v1001, 7
        %v1003 = vsub.s32 %v1000, %v1002
        %v1004 = vrot.slane %v996, %v1003
        %v1006 = vunpack.c.l.s4 1983009808
        %v1007 = vunpack.c.0.s8 %v1006
        %v1008 = vlaneseq
        %v1009 = vshrl.u32 %v1008, 7
        %v1010 = vsub.s32 %v1007, %v1009
        %v1011 = vrot.slane %v997, %v1010
        %v1012 = vcombine.low %v956, %v972
        %v1013 = vcombine.high %v956, %v972
        %v1015 = vunpack.c.l.s4 1934713408
        %v1016 = vunpack.c.0.s8 %v1015
        %v1017 = vlaneseq
        %v1018 = vshrl.u32 %v1017, 7
        %v1019 = vsub.s32 %v1016, %v1018
        %v1020 = vrot.slane %v1012, %v1019
        %v1022 = vunpack.c.l.s4 1934713408
        %v1023 = vunpack.c.0.s8 %v1022
        %v1024 = vlaneseq
        %v1025 = vshrl.u32 %v1024, 7
        %v1026 = vsub.s32 %v1023, %v1025
        %v1027 = vrot.slane %v1013, %v1026
        %v1028 = vcombine.low %v963, %v979
        %v1029 = vcombine.high %v963, %v979
        %v1031 = vunpack.c.l.s4 1934713408
        %v1032 = vunpack.c.0.s8 %v1031
        %v1033 = vlaneseq
        %v1034 = vshrl.u32 %v1033, 7
        %v1035 = vsub.s32 %v1032, %v1034
        %v1036 = vrot.slane %v1028, %v1035
        %v1038 = vunpack.c.l.s4 1934713408
        %v1039 = vunpack.c.0.s8 %v1038
        %v1040 = vlaneseq
        %v1041 = vshrl.u32 %v1040, 7
        %v1042 = vsub.s32 %v1039, %v1041
        %v1043 = vrot.slane %v1029, %v1042
        %v1044 = vcombine.low %v988, %v1004
        %v1045 = vcombine.high %v988, %v1004
        %v1047 = vunpack.c.l.s4 1934713408
        %v1048 = vunpack.c.0.s8 %v1047
        %v1049 = vlaneseq
        %v1050 = vshrl.u32 %v1049, 7
        %v1051 = vsub.s32 %v1048, %v1050
        %v1052 = vrot.slane %v1044, %v1051
        %v1054 = vunpack.c.l.s4 1934713408
        %v1055 = vunpack.c.0.s8 %v1054
        %v1056 = vlaneseq
        %v1057 = vshrl.u32 %v1056, 7
        %v1058 = vsub.s32 %v1055, %v1057
        %v1059 = vrot.slane %v1045, %v1058
        %v1060 = vcombine.low %v995, %v1011
        %v1061 = vcombine.high %v995, %v1011
        %v1063 = vunpack.c.l.s4 1934713408
        %v1064 = vunpack.c.0.s8 %v1063
        %v1065 = vlaneseq
        %v1066 = vshrl.u32 %v1065, 7
        %v1067 = vsub.s32 %v1064, %v1066
        %v1068 = vrot.slane %v1060, %v1067
        %v1070 = vunpack.c.l.s4 1934713408
        %v1071 = vunpack.c.0.s8 %v1070
        %v1072 = vlaneseq
        %v1073 = vshrl.u32 %v1072, 7
        %v1074 = vsub.s32 %v1071, %v1073
        %v1075 = vrot.slane %v1061, %v1074
        %v1076 = vcombine.low %v1020, %v1052
        %v1077 = vcombine.high %v1020, %v1052
        %v1078 = vcombine.low %v1027, %v1059
        %v1079 = vcombine.high %v1027, %v1059
        %v1080 = vcombine.low %v1036, %v1068
        %v1081 = vcombine.high %v1036, %v1068
        %v1082 = vcombine.low %v1043, %v1075
        %v1083 = vcombine.high %v1043, %v1075
        %v1084 = vcombine.low %v517, %v525
        %v1085 = vcombine.high %v517, %v525
        %v1087 = vunpack.c.l.s4 1983009808
        %v1088 = vunpack.c.0.s8 %v1087
        %v1089 = vlaneseq
        %v1090 = vshrl.u32 %v1089, 7
        %v1091 = vsub.s32 %v1088, %v1090
        %v1092 = vrot.slane %v1084, %v1091
        %v1094 = vunpack.c.l.s4 1983009808
        %v1095 = vunpack.c.0.s8 %v1094
        %v1096 = vlaneseq
        %v1097 = vshrl.u32 %v1096, 7
        %v1098 = vsub.s32 %v1095, %v1097
        %v1099 = vrot.slane %v1085, %v1098
        %v1100 = vcombine.low %v521, %v529
        %v1101 = vcombine.high %v521, %v529
        %v1103 = vunpack.c.l.s4 1983009808
        %v1104 = vunpack.c.0.s8 %v1103
        %v1105 = vlaneseq
        %v1106 = vshrl.u32 %v1105, 7
        %v1107 = vsub.s32 %v1104, %v1106
        %v1108 = vrot.slane %v1100, %v1107
        %v1110 = vunpack.c.l.s4 1983009808
        %v1111 = vunpack.c.0.s8 %v1110
        %v1112 = vlaneseq
        %v1113 = vshrl.u32 %v1112, 7
        %v1114 = vsub.s32 %v1111, %v1113
        %v1115 = vrot.slane %v1101, %v1114
        %v1116 = vcombine.low %v1092, %v1108
        %v1117 = vcombine.high %v1092, %v1108
        %v1119 = vunpack.c.l.s4 1934713408
        %v1120 = vunpack.c.0.s8 %v1119
        %v1121 = vlaneseq
        %v1122 = vshrl.u32 %v1121, 7
        %v1123 = vsub.s32 %v1120, %v1122
        %v1124 = vrot.slane %v1116, %v1123
        %v1126 = vunpack.c.l.s4 1934713408
        %v1127 = vunpack.c.0.s8 %v1126
        %v1128 = vlaneseq
        %v1129 = vshrl.u32 %v1128, 7
        %v1130 = vsub.s32 %v1127, %v1129
        %v1131 = vrot.slane %v1117, %v1130
        %v1132 = vcombine.low %v1099, %v1115
        %v1133 = vcombine.high %v1099, %v1115
        %v1135 = vunpack.c.l.s4 1934713408
        %v1136 = vunpack.c.0.s8 %v1135
        %v1137 = vlaneseq
        %v1138 = vshrl.u32 %v1137, 7
        %v1139 = vsub.s32 %v1136, %v1138
        %v1140 = vrot.slane %v1132, %v1139
        %v1142 = vunpack.c.l.s4 1934713408
        %v1143 = vunpack.c.0.s8 %v1142
        %v1144 = vlaneseq
        %v1145 = vshrl.u32 %v1144, 7
        %v1146 = vsub.s32 %v1143, %v1145
        %v1147 = vrot.slane %v1133, %v1146
        %v1148 = vcombine.high %v1124, 0.0
        %v1149 = vcombine.high %v1131, 0.0
        %v1150 = vcombine.high %v1140, 0.0
        %v1151 = vcombine.high %v1147, 0.0
        %v1152 = vcombine.low %v315, %v321
        %v1153 = vcombine.high %v315, %v321
        %v1155 = vunpack.c.l.s4 1983009808
        %v1156 = vunpack.c.0.s8 %v1155
        %v1157 = vlaneseq
        %v1158 = vshrl.u32 %v1157, 7
        %v1159 = vsub.s32 %v1156, %v1158
        %v1160 = vrot.slane %v1152, %v1159
        %v1162 = vunpack.c.l.s4 1983009808
        %v1163 = vunpack.c.0.s8 %v1162
        %v1164 = vlaneseq
        %v1165 = vshrl.u32 %v1164, 7
        %v1166 = vsub.s32 %v1163, %v1165
        %v1167 = vrot.slane %v1153, %v1166
        %v1168 = vcombine.low %v318, %v324
        %v1169 = vcombine.high %v318, %v324
        %v1171 = vunpack.c.l.s4 1983009808
        %v1172 = vunpack.c.0.s8 %v1171
        %v1173 = vlaneseq
        %v1174 = vshrl.u32 %v1173, 7
        %v1175 = vsub.s32 %v1172, %v1174
        %v1176 = vrot.slane %v1168, %v1175
        %v1178 = vunpack.c.l.s4 1983009808
        %v1179 = vunpack.c.0.s8 %v1178
        %v1180 = vlaneseq
        %v1181 = vshrl.u32 %v1180, 7
        %v1182 = vsub.s32 %v1179, %v1181
        %v1183 = vrot.slane %v1169, %v1182
        %v1184 = vcombine.low %v337, %v345
        %v1185 = vcombine.high %v337, %v345
        %v1187 = vunpack.c.l.s4 1983009808
        %v1188 = vunpack.c.0.s8 %v1187
        %v1189 = vlaneseq
        %v1190 = vshrl.u32 %v1189, 7
        %v1191 = vsub.s32 %v1188, %v1190
        %v1192 = vrot.slane %v1184, %v1191
        %v1194 = vunpack.c.l.s4 1983009808
        %v1195 = vunpack.c.0.s8 %v1194
        %v1196 = vlaneseq
        %v1197 = vshrl.u32 %v1196, 7
        %v1198 = vsub.s32 %v1195, %v1197
        %v1199 = vrot.slane %v1185, %v1198
        %v1200 = vcombine.low %v341, %v349
        %v1201 = vcombine.high %v341, %v349
        %v1203 = vunpack.c.l.s4 1983009808
        %v1204 = vunpack.c.0.s8 %v1203
        %v1205 = vlaneseq
        %v1206 = vshrl.u32 %v1205, 7
        %v1207 = vsub.s32 %v1204, %v1206
        %v1208 = vrot.slane %v1200, %v1207
        %v1210 = vunpack.c.l.s4 1983009808
        %v1211 = vunpack.c.0.s8 %v1210
        %v1212 = vlaneseq
        %v1213 = vshrl.u32 %v1212, 7
        %v1214 = vsub.s32 %v1211, %v1213
        %v1215 = vrot.slane %v1201, %v1214
        %v1216 = vcombine.low %v1160, %v1176
        %v1217 = vcombine.high %v1160, %v1176
        %v1219 = vunpack.c.l.s4 1934713408
        %v1220 = vunpack.c.0.s8 %v1219
        %v1221 = vlaneseq
        %v1222 = vshrl.u32 %v1221, 7
        %v1223 = vsub.s32 %v1220, %v1222
        %v1224 = vrot.slane %v1216, %v1223
        %v1226 = vunpack.c.l.s4 1934713408
        %v1227 = vunpack.c.0.s8 %v1226
        %v1228 = vlaneseq
        %v1229 = vshrl.u32 %v1228, 7
        %v1230 = vsub.s32 %v1227, %v1229
        %v1231 = vrot.slane %v1217, %v1230
        %v1232 = vcombine.low %v1167, %v1183
        %v1233 = vcombine.high %v1167, %v1183
        %v1235 = vunpack.c.l.s4 1934713408
        %v1236 = vunpack.c.0.s8 %v1235
        %v1237 = vlaneseq
        %v1238 = vshrl.u32 %v1237, 7
        %v1239 = vsub.s32 %v1236, %v1238
        %v1240 = vrot.slane %v1232, %v1239
        %v1242 = vunpack.c.l.s4 1934713408
        %v1243 = vunpack.c.0.s8 %v1242
        %v1244 = vlaneseq
        %v1245 = vshrl.u32 %v1244, 7
        %v1246 = vsub.s32 %v1243, %v1245
        %v1247 = vrot.slane %v1233, %v1246
        %v1248 = vcombine.low %v1192, %v1208
        %v1249 = vcombine.high %v1192, %v1208
        %v1251 = vunpack.c.l.s4 1934713408
        %v1252 = vunpack.c.0.s8 %v1251
        %v1253 = vlaneseq
        %v1254 = vshrl.u32 %v1253, 7
        %v1255 = vsub.s32 %v1252, %v1254
        %v1256 = vrot.slane %v1248, %v1255
        %v1258 = vunpack.c.l.s4 1934713408
        %v1259 = vunpack.c.0.s8 %v1258
        %v1260 = vlaneseq
        %v1261 = vshrl.u32 %v1260, 7
        %v1262 = vsub.s32 %v1259, %v1261
        %v1263 = vrot.slane %v1249, %v1262
        %v1264 = vcombine.low %v1199, %v1215
        %v1265 = vcombine.high %v1199, %v1215
        %v1267 = vunpack.c.l.s4 1934713408
        %v1268 = vunpack.c.0.s8 %v1267
        %v1269 = vlaneseq
        %v1270 = vshrl.u32 %v1269, 7
        %v1271 = vsub.s32 %v1268, %v1270
        %v1272 = vrot.slane %v1264, %v1271
        %v1274 = vunpack.c.l.s4 1934713408
        %v1275 = vunpack.c.0.s8 %v1274
        %v1276 = vlaneseq
        %v1277 = vshrl.u32 %v1276, 7
        %v1278 = vsub.s32 %v1275, %v1277
        %v1279 = vrot.slane %v1265, %v1278
        %v1280 = vcombine.low %v1224, %v1256
        %v1281 = vcombine.high %v1224, %v1256
        %v1282 = vcombine.low %v1231, %v1263
        %v1283 = vcombine.high %v1231, %v1263
        %v1284 = vcombine.low %v1240, %v1272
        %v1285 = vcombine.high %v1240, %v1272
        %v1286 = vcombine.low %v1247, %v1279
        %v1287 = vcombine.high %v1247, %v1279
        %v1288 = vcombine.low %v361, %v369
        %v1289 = vcombine.high %v361, %v369
        %v1291 = vunpack.c.l.s4 1983009808
        %v1292 = vunpack.c.0.s8 %v1291
        %v1293 = vlaneseq
        %v1294 = vshrl.u32 %v1293, 7
        %v1295 = vsub.s32 %v1292, %v1294
        %v1296 = vrot.slane %v1288, %v1295
        %v1298 = vunpack.c.l.s4 1983009808
        %v1299 = vunpack.c.0.s8 %v1298
        %v1300 = vlaneseq
        %v1301 = vshrl.u32 %v1300, 7
        %v1302 = vsub.s32 %v1299, %v1301
        %v1303 = vrot.slane %v1289, %v1302
        %v1304 = vcombine.low %v365, %v373
        %v1305 = vcombine.high %v365, %v373
        %v1307 = vunpack.c.l.s4 1983009808
        %v1308 = vunpack.c.0.s8 %v1307
        %v1309 = vlaneseq
        %v1310 = vshrl.u32 %v1309, 7
        %v1311 = vsub.s32 %v1308, %v1310
        %v1312 = vrot.slane %v1304, %v1311
        %v1314 = vunpack.c.l.s4 1983009808
        %v1315 = vunpack.c.0.s8 %v1314
        %v1316 = vlaneseq
        %v1317 = vshrl.u32 %v1316, 7
        %v1318 = vsub.s32 %v1315, %v1317
        %v1319 = vrot.slane %v1305, %v1318
        %v1320 = vcombine.low %v391, %v401
        %v1321 = vcombine.high %v391, %v401
        %v1323 = vunpack.c.l.s4 1983009808
        %v1324 = vunpack.c.0.s8 %v1323
        %v1325 = vlaneseq
        %v1326 = vshrl.u32 %v1325, 7
        %v1327 = vsub.s32 %v1324, %v1326
        %v1328 = vrot.slane %v1320, %v1327
        %v1330 = vunpack.c.l.s4 1983009808
        %v1331 = vunpack.c.0.s8 %v1330
        %v1332 = vlaneseq
        %v1333 = vshrl.u32 %v1332, 7
        %v1334 = vsub.s32 %v1331, %v1333
        %v1335 = vrot.slane %v1321, %v1334
        %v1336 = vcombine.low %v396, %v406
        %v1337 = vcombine.high %v396, %v406
        %v1339 = vunpack.c.l.s4 1983009808
        %v1340 = vunpack.c.0.s8 %v1339
        %v1341 = vlaneseq
        %v1342 = vshrl.u32 %v1341, 7
        %v1343 = vsub.s32 %v1340, %v1342
        %v1344 = vrot.slane %v1336, %v1343
        %v1346 = vunpack.c.l.s4 1983009808
        %v1347 = vunpack.c.0.s8 %v1346
        %v1348 = vlaneseq
        %v1349 = vshrl.u32 %v1348, 7
        %v1350 = vsub.s32 %v1347, %v1349
        %v1351 = vrot.slane %v1337, %v1350
        %v1352 = vcombine.low %v1296, %v1312
        %v1353 = vcombine.high %v1296, %v1312
        %v1355 = vunpack.c.l.s4 1934713408
        %v1356 = vunpack.c.0.s8 %v1355
        %v1357 = vlaneseq
        %v1358 = vshrl.u32 %v1357, 7
        %v1359 = vsub.s32 %v1356, %v1358
        %v1360 = vrot.slane %v1352, %v1359
        %v1362 = vunpack.c.l.s4 1934713408
        %v1363 = vunpack.c.0.s8 %v1362
        %v1364 = vlaneseq
        %v1365 = vshrl.u32 %v1364, 7
        %v1366 = vsub.s32 %v1363, %v1365
        %v1367 = vrot.slane %v1353, %v1366
        %v1368 = vcombine.low %v1303, %v1319
        %v1369 = vcombine.high %v1303, %v1319
        %v1371 = vunpack.c.l.s4 1934713408
        %v1372 = vunpack.c.0.s8 %v1371
        %v1373 = vlaneseq
        %v1374 = vshrl.u32 %v1373, 7
        %v1375 = vsub.s32 %v1372, %v1374
        %v1376 = vrot.slane %v1368, %v1375
        %v1378 = vunpack.c.l.s4 1934713408
        %v1379 = vunpack.c.0.s8 %v1378
        %v1380 = vlaneseq
        %v1381 = vshrl.u32 %v1380, 7
        %v1382 = vsub.s32 %v1379, %v1381
        %v1383 = vrot.slane %v1369, %v1382
        %v1384 = vcombine.low %v1328, %v1344
        %v1385 = vcombine.high %v1328, %v1344
        %v1387 = vunpack.c.l.s4 1934713408
        %v1388 = vunpack.c.0.s8 %v1387
        %v1389 = vlaneseq
        %v1390 = vshrl.u32 %v1389, 7
        %v1391 = vsub.s32 %v1388, %v1390
        %v1392 = vrot.slane %v1384, %v1391
        %v1394 = vunpack.c.l.s4 1934713408
        %v1395 = vunpack.c.0.s8 %v1394
        %v1396 = vlaneseq
        %v1397 = vshrl.u32 %v1396, 7
        %v1398 = vsub.s32 %v1395, %v1397
        %v1399 = vrot.slane %v1385, %v1398
        %v1400 = vcombine.low %v1335, %v1351
        %v1401 = vcombine.high %v1335, %v1351
        %v1403 = vunpack.c.l.s4 1934713408
        %v1404 = vunpack.c.0.s8 %v1403
        %v1405 = vlaneseq
        %v1406 = vshrl.u32 %v1405, 7
        %v1407 = vsub.s32 %v1404, %v1406
        %v1408 = vrot.slane %v1400, %v1407
        %v1410 = vunpack.c.l.s4 1934713408
        %v1411 = vunpack.c.0.s8 %v1410
        %v1412 = vlaneseq
        %v1413 = vshrl.u32 %v1412, 7
        %v1414 = vsub.s32 %v1411, %v1413
        %v1415 = vrot.slane %v1401, %v1414
        %v1416 = vcombine.low %v1360, %v1392
        %v1417 = vcombine.high %v1360, %v1392
        %v1418 = vcombine.low %v1367, %v1399
        %v1419 = vcombine.high %v1367, %v1399
        %v1420 = vcombine.low %v1376, %v1408
        %v1421 = vcombine.high %v1376, %v1408
        %v1422 = vcombine.low %v1383, %v1415
        %v1423 = vcombine.high %v1383, %v1415
        %v1424 = vcombine.low %v418, %v426
        %v1425 = vcombine.high %v418, %v426
        %v1427 = vunpack.c.l.s4 1983009808
        %v1428 = vunpack.c.0.s8 %v1427
        %v1429 = vlaneseq
        %v1430 = vshrl.u32 %v1429, 7
        %v1431 = vsub.s32 %v1428, %v1430
        %v1432 = vrot.slane %v1424, %v1431
        %v1434 = vunpack.c.l.s4 1983009808
        %v1435 = vunpack.c.0.s8 %v1434
        %v1436 = vlaneseq
        %v1437 = vshrl.u32 %v1436, 7
        %v1438 = vsub.s32 %v1435, %v1437
        %v1439 = vrot.slane %v1425, %v1438
        %v1440 = vcombine.low %v422, %v430
        %v1441 = vcombine.high %v422, %v430
        %v1443 = vunpack.c.l.s4 1983009808
        %v1444 = vunpack.c.0.s8 %v1443
        %v1445 = vlaneseq
        %v1446 = vshrl.u32 %v1445, 7
        %v1447 = vsub.s32 %v1444, %v1446
        %v1448 = vrot.slane %v1440, %v1447
        %v1450 = vunpack.c.l.s4 1983009808
        %v1451 = vunpack.c.0.s8 %v1450
        %v1452 = vlaneseq
        %v1453 = vshrl.u32 %v1452, 7
        %v1454 = vsub.s32 %v1451, %v1453
        %v1455 = vrot.slane %v1441, %v1454
        %v1456 = vcombine.low %v442, %v450
        %v1457 = vcombine.high %v442, %v450
        %v1459 = vunpack.c.l.s4 1983009808
        %v1460 = vunpack.c.0.s8 %v1459
        %v1461 = vlaneseq
        %v1462 = vshrl.u32 %v1461, 7
        %v1463 = vsub.s32 %v1460, %v1462
        %v1464 = vrot.slane %v1456, %v1463
        %v1466 = vunpack.c.l.s4 1983009808
        %v1467 = vunpack.c.0.s8 %v1466
        %v1468 = vlaneseq
        %v1469 = vshrl.u32 %v1468, 7
        %v1470 = vsub.s32 %v1467, %v1469
        %v1471 = vrot.slane %v1457, %v1470
        %v1472 = vcombine.low %v446, %v454
        %v1473 = vcombine.high %v446, %v454
        %v1475 = vunpack.c.l.s4 1983009808
        %v1476 = vunpack.c.0.s8 %v1475
        %v1477 = vlaneseq
        %v1478 = vshrl.u32 %v1477, 7
        %v1479 = vsub.s32 %v1476, %v1478
        %v1480 = vrot.slane %v1472, %v1479
        %v1482 = vunpack.c.l.s4 1983009808
        %v1483 = vunpack.c.0.s8 %v1482
        %v1484 = vlaneseq
        %v1485 = vshrl.u32 %v1484, 7
        %v1486 = vsub.s32 %v1483, %v1485
        %v1487 = vrot.slane %v1473, %v1486
        %v1488 = vcombine.low %v1432, %v1448
        %v1489 = vcombine.high %v1432, %v1448
        %v1491 = vunpack.c.l.s4 1934713408
        %v1492 = vunpack.c.0.s8 %v1491
        %v1493 = vlaneseq
        %v1494 = vshrl.u32 %v1493, 7
        %v1495 = vsub.s32 %v1492, %v1494
        %v1496 = vrot.slane %v1488, %v1495
        %v1498 = vunpack.c.l.s4 1934713408
        %v1499 = vunpack.c.0.s8 %v1498
        %v1500 = vlaneseq
        %v1501 = vshrl.u32 %v1500, 7
        %v1502 = vsub.s32 %v1499, %v1501
        %v1503 = vrot.slane %v1489, %v1502
        %v1504 = vcombine.low %v1439, %v1455
        %v1505 = vcombine.high %v1439, %v1455
        %v1507 = vunpack.c.l.s4 1934713408
        %v1508 = vunpack.c.0.s8 %v1507
        %v1509 = vlaneseq
        %v1510 = vshrl.u32 %v1509, 7
        %v1511 = vsub.s32 %v1508, %v1510
        %v1512 = vrot.slane %v1504, %v1511
        %v1514 = vunpack.c.l.s4 1934713408
        %v1515 = vunpack.c.0.s8 %v1514
        %v1516 = vlaneseq
        %v1517 = vshrl.u32 %v1516, 7
        %v1518 = vsub.s32 %v1515, %v1517
        %v1519 = vrot.slane %v1505, %v1518
        %v1520 = vcombine.low %v1464, %v1480
        %v1521 = vcombine.high %v1464, %v1480
        %v1523 = vunpack.c.l.s4 1934713408
        %v1524 = vunpack.c.0.s8 %v1523
        %v1525 = vlaneseq
        %v1526 = vshrl.u32 %v1525, 7
        %v1527 = vsub.s32 %v1524, %v1526
        %v1528 = vrot.slane %v1520, %v1527
        %v1530 = vunpack.c.l.s4 1934713408
        %v1531 = vunpack.c.0.s8 %v1530
        %v1532 = vlaneseq
        %v1533 = vshrl.u32 %v1532, 7
        %v1534 = vsub.s32 %v1531, %v1533
        %v1535 = vrot.slane %v1521, %v1534
        %v1536 = vcombine.low %v1471, %v1487
        %v1537 = vcombine.high %v1471, %v1487
        %v1539 = vunpack.c.l.s4 1934713408
        %v1540 = vunpack.c.0.s8 %v1539
        %v1541 = vlaneseq
        %v1542 = vshrl.u32 %v1541, 7
        %v1543 = vsub.s32 %v1540, %v1542
        %v1544 = vrot.slane %v1536, %v1543
        %v1546 = vunpack.c.l.s4 1934713408
        %v1547 = vunpack.c.0.s8 %v1546
        %v1548 = vlaneseq
        %v1549 = vshrl.u32 %v1548, 7
        %v1550 = vsub.s32 %v1547, %v1549
        %v1551 = vrot.slane %v1537, %v1550
        %v1552 = vcombine.low %v1496, %v1528
        %v1553 = vcombine.high %v1496, %v1528
        %v1554 = vcombine.low %v1503, %v1535
        %v1555 = vcombine.high %v1503, %v1535
        %v1556 = vcombine.low %v1512, %v1544
        %v1557 = vcombine.high %v1512, %v1544
        %v1558 = vcombine.low %v1519, %v1551
        %v1559 = vcombine.high %v1519, %v1551
        %v1560 = vcombine.low %v468, %v478
        %v1561 = vcombine.high %v468, %v478
        %v1563 = vunpack.c.l.s4 1983009808
        %v1564 = vunpack.c.0.s8 %v1563
        %v1565 = vlaneseq
        %v1566 = vshrl.u32 %v1565, 7
        %v1567 = vsub.s32 %v1564, %v1566
        %v1568 = vrot.slane %v1560, %v1567
        %v1570 = vunpack.c.l.s4 1983009808
        %v1571 = vunpack.c.0.s8 %v1570
        %v1572 = vlaneseq
        %v1573 = vshrl.u32 %v1572, 7
        %v1574 = vsub.s32 %v1571, %v1573
        %v1575 = vrot.slane %v1561, %v1574
        %v1576 = vcombine.low %v473, %v483
        %v1577 = vcombine.high %v473, %v483
        %v1579 = vunpack.c.l.s4 1983009808
        %v1580 = vunpack.c.0.s8 %v1579
        %v1581 = vlaneseq
        %v1582 = vshrl.u32 %v1581, 7
        %v1583 = vsub.s32 %v1580, %v1582
        %v1584 = vrot.slane %v1576, %v1583
        %v1586 = vunpack.c.l.s4 1983009808
        %v1587 = vunpack.c.0.s8 %v1586
        %v1588 = vlaneseq
        %v1589 = vshrl.u32 %v1588, 7
        %v1590 = vsub.s32 %v1587, %v1589
        %v1591 = vrot.slane %v1577, %v1590
        %v1592 = vcombine.low %v495, %v503
        %v1593 = vcombine.high %v495, %v503
        %v1595 = vunpack.c.l.s4 1983009808
        %v1596 = vunpack.c.0.s8 %v1595
        %v1597 = vlaneseq
        %v1598 = vshrl.u32 %v1597, 7
        %v1599 = vsub.s32 %v1596, %v1598
        %v1600 = vrot.slane %v1592, %v1599
        %v1602 = vunpack.c.l.s4 1983009808
        %v1603 = vunpack.c.0.s8 %v1602
        %v1604 = vlaneseq
        %v1605 = vshrl.u32 %v1604, 7
        %v1606 = vsub.s32 %v1603, %v1605
        %v1607 = vrot.slane %v1593, %v1606
        %v1608 = vcombine.low %v499, %v507
        %v1609 = vcombine.high %v499, %v507
        %v1611 = vunpack.c.l.s4 1983009808
        %v1612 = vunpack.c.0.s8 %v1611
        %v1613 = vlaneseq
        %v1614 = vshrl.u32 %v1613, 7
        %v1615 = vsub.s32 %v1612, %v1614
        %v1616 = vrot.slane %v1608, %v1615
        %v1618 = vunpack.c.l.s4 1983009808
        %v1619 = vunpack.c.0.s8 %v1618
        %v1620 = vlaneseq
        %v1621 = vshrl.u32 %v1620, 7
        %v1622 = vsub.s32 %v1619, %v1621
        %v1623 = vrot.slane %v1609, %v1622
        %v1624 = vcombine.low %v1568, %v1584
        %v1625 = vcombine.high %v1568, %v1584
        %v1627 = vunpack.c.l.s4 1934713408
        %v1628 = vunpack.c.0.s8 %v1627
        %v1629 = vlaneseq
        %v1630 = vshrl.u32 %v1629, 7
        %v1631 = vsub.s32 %v1628, %v1630
        %v1632 = vrot.slane %v1624, %v1631
        %v1634 = vunpack.c.l.s4 1934713408
        %v1635 = vunpack.c.0.s8 %v1634
        %v1636 = vlaneseq
        %v1637 = vshrl.u32 %v1636, 7
        %v1638 = vsub.s32 %v1635, %v1637
        %v1639 = vrot.slane %v1625, %v1638
        %v1640 = vcombine.low %v1575, %v1591
        %v1641 = vcombine.high %v1575, %v1591
        %v1643 = vunpack.c.l.s4 1934713408
        %v1644 = vunpack.c.0.s8 %v1643
        %v1645 = vlaneseq
        %v1646 = vshrl.u32 %v1645, 7
        %v1647 = vsub.s32 %v1644, %v1646
        %v1648 = vrot.slane %v1640, %v1647
        %v1650 = vunpack.c.l.s4 1934713408
        %v1651 = vunpack.c.0.s8 %v1650
        %v1652 = vlaneseq
        %v1653 = vshrl.u32 %v1652, 7
        %v1654 = vsub.s32 %v1651, %v1653
        %v1655 = vrot.slane %v1641, %v1654
        %v1656 = vcombine.low %v1600, %v1616
        %v1657 = vcombine.high %v1600, %v1616
        %v1659 = vunpack.c.l.s4 1934713408
        %v1660 = vunpack.c.0.s8 %v1659
        %v1661 = vlaneseq
        %v1662 = vshrl.u32 %v1661, 7
        %v1663 = vsub.s32 %v1660, %v1662
        %v1664 = vrot.slane %v1656, %v1663
        %v1666 = vunpack.c.l.s4 1934713408
        %v1667 = vunpack.c.0.s8 %v1666
        %v1668 = vlaneseq
        %v1669 = vshrl.u32 %v1668, 7
        %v1670 = vsub.s32 %v1667, %v1669
        %v1671 = vrot.slane %v1657, %v1670
        %v1672 = vcombine.low %v1607, %v1623
        %v1673 = vcombine.high %v1607, %v1623
        %v1675 = vunpack.c.l.s4 1934713408
        %v1676 = vunpack.c.0.s8 %v1675
        %v1677 = vlaneseq
        %v1678 = vshrl.u32 %v1677, 7
        %v1679 = vsub.s32 %v1676, %v1678
        %v1680 = vrot.slane %v1672, %v1679
        %v1682 = vunpack.c.l.s4 1934713408
        %v1683 = vunpack.c.0.s8 %v1682
        %v1684 = vlaneseq
        %v1685 = vshrl.u32 %v1684, 7
        %v1686 = vsub.s32 %v1683, %v1685
        %v1687 = vrot.slane %v1673, %v1686
        %v1688 = vcombine.low %v1632, %v1664
        %v1689 = vcombine.high %v1632, %v1664
        %v1690 = vcombine.low %v1639, %v1671
        %v1691 = vcombine.high %v1639, %v1671
        %v1692 = vcombine.low %v1648, %v1680
        %v1693 = vcombine.high %v1648, %v1680
        %v1694 = vcombine.low %v1655, %v1687
        %v1695 = vcombine.high %v1655, %v1687
        %v1696 = vcombine.low %v519, %v527
        %v1697 = vcombine.high %v519, %v527
        %v1699 = vunpack.c.l.s4 1983009808
        %v1700 = vunpack.c.0.s8 %v1699
        %v1701 = vlaneseq
        %v1702 = vshrl.u32 %v1701, 7
        %v1703 = vsub.s32 %v1700, %v1702
        %v1704 = vrot.slane %v1696, %v1703
        %v1706 = vunpack.c.l.s4 1983009808
        %v1707 = vunpack.c.0.s8 %v1706
        %v1708 = vlaneseq
        %v1709 = vshrl.u32 %v1708, 7
        %v1710 = vsub.s32 %v1707, %v1709
        %v1711 = vrot.slane %v1697, %v1710
        %v1712 = vcombine.low %v523, %v531
        %v1713 = vcombine.high %v523, %v531
        %v1715 = vunpack.c.l.s4 1983009808
        %v1716 = vunpack.c.0.s8 %v1715
        %v1717 = vlaneseq
        %v1718 = vshrl.u32 %v1717, 7
        %v1719 = vsub.s32 %v1716, %v1718
        %v1720 = vrot.slane %v1712, %v1719
        %v1722 = vunpack.c.l.s4 1983009808
        %v1723 = vunpack.c.0.s8 %v1722
        %v1724 = vlaneseq
        %v1725 = vshrl.u32 %v1724, 7
        %v1726 = vsub.s32 %v1723, %v1725
        %v1727 = vrot.slane %v1713, %v1726
        %v1728 = vcombine.low %v1704, %v1720
        %v1729 = vcombine.high %v1704, %v1720
        %v1731 = vunpack.c.l.s4 1934713408
        %v1732 = vunpack.c.0.s8 %v1731
        %v1733 = vlaneseq
        %v1734 = vshrl.u32 %v1733, 7
        %v1735 = vsub.s32 %v1732, %v1734
        %v1736 = vrot.slane %v1728, %v1735
        %v1738 = vunpack.c.l.s4 1934713408
        %v1739 = vunpack.c.0.s8 %v1738
        %v1740 = vlaneseq
        %v1741 = vshrl.u32 %v1740, 7
        %v1742 = vsub.s32 %v1739, %v1741
        %v1743 = vrot.slane %v1729, %v1742
        %v1744 = vcombine.low %v1711, %v1727
        %v1745 = vcombine.high %v1711, %v1727
        %v1747 = vunpack.c.l.s4 1934713408
        %v1748 = vunpack.c.0.s8 %v1747
        %v1749 = vlaneseq
        %v1750 = vshrl.u32 %v1749, 7
        %v1751 = vsub.s32 %v1748, %v1750
        %v1752 = vrot.slane %v1744, %v1751
        %v1754 = vunpack.c.l.s4 1934713408
        %v1755 = vunpack.c.0.s8 %v1754
        %v1756 = vlaneseq
        %v1757 = vshrl.u32 %v1756, 7
        %v1758 = vsub.s32 %v1755, %v1757
        %v1759 = vrot.slane %v1745, %v1758
        %v1760 = vcombine.high %v1736, 0.0
        %v1761 = vcombine.high %v1743, 0.0
        %v1762 = vcombine.high %v1752, 0.0
        %v1763 = vcombine.high %v1759, 0.0
        %1769 = vrot.lane.b32.xlu0 %v669, 16
        %v1770 = vpop.permute.xlu0 %1769
        %1771 = vrot.lane.b32.xlu0 %v805, 16
        %v1772 = vpop.permute.xlu0 %1771
        %1773 = vrot.lane.b32.xlu0 %v941, 16
        %v1774 = vpop.permute.xlu0 %1773
        %1775 = vrot.lane.b32.xlu0 %v1077, 16
        %v1776 = vpop.permute.xlu0 %1775
        %1777 = vrot.lane.b32.xlu0 %v1148, 16
        %v1778 = vpop.permute.xlu0 %1777
        %1789 = vrot.lane.b32.xlu0 %v670, 32
        %v1790 = vpop.permute.xlu0 %1789
        %1791 = vrot.lane.b32.xlu0 %v806, 32
        %v1792 = vpop.permute.xlu0 %1791
        %1793 = vrot.lane.b32.xlu0 %v942, 32
        %v1794 = vpop.permute.xlu0 %1793
        %1795 = vrot.lane.b32.xlu0 %v1078, 32
        %v1796 = vpop.permute.xlu0 %1795
        %1797 = vrot.lane.b32.xlu0 %v1131, 32
        %v1798 = vpop.permute.xlu0 %1797
        %1809 = vrot.lane.b32.xlu0 %v671, 48
        %v1810 = vpop.permute.xlu0 %1809
        %1811 = vrot.lane.b32.xlu0 %v807, 48
        %v1812 = vpop.permute.xlu0 %1811
        %1813 = vrot.lane.b32.xlu0 %v943, 48
        %v1814 = vpop.permute.xlu0 %1813
        %1815 = vrot.lane.b32.xlu0 %v1079, 48
        %v1816 = vpop.permute.xlu0 %1815
        %1817 = vrot.lane.b32.xlu0 %v1149, 48
        %v1818 = vpop.permute.xlu0 %1817
        %1829 = vrot.lane.b32.xlu0 %v672, 64
        %v1830 = vpop.permute.xlu0 %1829
        %1831 = vrot.lane.b32.xlu0 %v808, 64
        %v1832 = vpop.permute.xlu0 %1831
        %1833 = vrot.lane.b32.xlu0 %v944, 64
        %v1834 = vpop.permute.xlu0 %1833
        %1835 = vrot.lane.b32.xlu0 %v1080, 64
        %v1836 = vpop.permute.xlu0 %1835
        %1837 = vrot.lane.b32.xlu0 %v1140, 64
        %v1838 = vpop.permute.xlu0 %1837
        %1849 = vrot.lane.b32.xlu0 %v673, 80
        %v1850 = vpop.permute.xlu0 %1849
        %1851 = vrot.lane.b32.xlu0 %v809, 80
        %v1852 = vpop.permute.xlu0 %1851
        %1853 = vrot.lane.b32.xlu0 %v945, 80
        %v1854 = vpop.permute.xlu0 %1853
        %1855 = vrot.lane.b32.xlu0 %v1081, 80
        %v1856 = vpop.permute.xlu0 %1855
        %1857 = vrot.lane.b32.xlu0 %v1150, 80
        %v1858 = vpop.permute.xlu0 %1857
        %1869 = vrot.lane.b32.xlu0 %v674, 96
        %v1870 = vpop.permute.xlu0 %1869
        %1871 = vrot.lane.b32.xlu0 %v810, 96
        %v1872 = vpop.permute.xlu0 %1871
        %1873 = vrot.lane.b32.xlu0 %v946, 96
        %v1874 = vpop.permute.xlu0 %1873
        %1875 = vrot.lane.b32.xlu0 %v1082, 96
        %v1876 = vpop.permute.xlu0 %1875
        %1877 = vrot.lane.b32.xlu0 %v1147, 96
        %v1878 = vpop.permute.xlu0 %1877
        %1889 = vrot.lane.b32.xlu0 %v675, 112
        %v1890 = vpop.permute.xlu0 %1889
        %1891 = vrot.lane.b32.xlu0 %v811, 112
        %v1892 = vpop.permute.xlu0 %1891
        %1893 = vrot.lane.b32.xlu0 %v947, 112
        %v1894 = vpop.permute.xlu0 %1893
        %1895 = vrot.lane.b32.xlu0 %v1083, 112
        %v1896 = vpop.permute.xlu0 %1895
        %1897 = vrot.lane.b32.xlu0 %v1151, 112
        %v1898 = vpop.permute.xlu0 %1897
        %1909 = vrot.lane.b32.xlu0 %v1281, 16
        %v1910 = vpop.permute.xlu0 %1909
        %1911 = vrot.lane.b32.xlu0 %v1417, 16
        %v1912 = vpop.permute.xlu0 %1911
        %1913 = vrot.lane.b32.xlu0 %v1553, 16
        %v1914 = vpop.permute.xlu0 %1913
        %1915 = vrot.lane.b32.xlu0 %v1689, 16
        %v1916 = vpop.permute.xlu0 %1915
        %1917 = vrot.lane.b32.xlu0 %v1760, 16
        %v1918 = vpop.permute.xlu0 %1917
        %1929 = vrot.lane.b32.xlu0 %v1282, 32
        %v1930 = vpop.permute.xlu0 %1929
        %1931 = vrot.lane.b32.xlu0 %v1418, 32
        %v1932 = vpop.permute.xlu0 %1931
        %1933 = vrot.lane.b32.xlu0 %v1554, 32
        %v1934 = vpop.permute.xlu0 %1933
        %1935 = vrot.lane.b32.xlu0 %v1690, 32
        %v1936 = vpop.permute.xlu0 %1935
        %1937 = vrot.lane.b32.xlu0 %v1743, 32
        %v1938 = vpop.permute.xlu0 %1937
        %1949 = vrot.lane.b32.xlu0 %v1283, 48
        %v1950 = vpop.permute.xlu0 %1949
        %1951 = vrot.lane.b32.xlu0 %v1419, 48
        %v1952 = vpop.permute.xlu0 %1951
        %1953 = vrot.lane.b32.xlu0 %v1555, 48
        %v1954 = vpop.permute.xlu0 %1953
        %1955 = vrot.lane.b32.xlu0 %v1691, 48
        %v1956 = vpop.permute.xlu0 %1955
        %1957 = vrot.lane.b32.xlu0 %v1761, 48
        %v1958 = vpop.permute.xlu0 %1957
        %1969 = vrot.lane.b32.xlu0 %v1284, 64
        %v1970 = vpop.permute.xlu0 %1969
        %1971 = vrot.lane.b32.xlu0 %v1420, 64
        %v1972 = vpop.permute.xlu0 %1971
        %1973 = vrot.lane.b32.xlu0 %v1556, 64
        %v1974 = vpop.permute.xlu0 %1973
        %1975 = vrot.lane.b32.xlu0 %v1692, 64
        %v1976 = vpop.permute.xlu0 %1975
        %1977 = vrot.lane.b32.xlu0 %v1752, 64
        %v1978 = vpop.permute.xlu0 %1977
        %1989 = vrot.lane.b32.xlu0 %v1285, 80
        %v1990 = vpop.permute.xlu0 %1989
        %1991 = vrot.lane.b32.xlu0 %v1421, 80
        %v1992 = vpop.permute.xlu0 %1991
        %1993 = vrot.lane.b32.xlu0 %v1557, 80
        %v1994 = vpop.permute.xlu0 %1993
        %1995 = vrot.lane.b32.xlu0 %v1693, 80
        %v1996 = vpop.permute.xlu0 %1995
        %1997 = vrot.lane.b32.xlu0 %v1762, 80
        %v1998 = vpop.permute.xlu0 %1997
        %2009 = vrot.lane.b32.xlu0 %v1286, 96
        %v2010 = vpop.permute.xlu0 %2009
        %2011 = vrot.lane.b32.xlu0 %v1422, 96
        %v2012 = vpop.permute.xlu0 %2011
        %2013 = vrot.lane.b32.xlu0 %v1558, 96
        %v2014 = vpop.permute.xlu0 %2013
        %2015 = vrot.lane.b32.xlu0 %v1694, 96
        %v2016 = vpop.permute.xlu0 %2015
        %2017 = vrot.lane.b32.xlu0 %v1759, 96
        %v2018 = vpop.permute.xlu0 %2017
        %2029 = vrot.lane.b32.xlu0 %v1287, 112
        %v2030 = vpop.permute.xlu0 %2029
        %2031 = vrot.lane.b32.xlu0 %v1423, 112
        %v2032 = vpop.permute.xlu0 %2031
        %2033 = vrot.lane.b32.xlu0 %v1559, 112
        %v2034 = vpop.permute.xlu0 %2033
        %2035 = vrot.lane.b32.xlu0 %v1695, 112
        %v2036 = vpop.permute.xlu0 %2035
        %2037 = vrot.lane.b32.xlu0 %v1763, 112
        %v2038 = vpop.permute.xlu0 %2037
        %vm2044 = vcmask 130048
        %v2045 = vsel %vm2044, %v668, %v1770
        %v2046 = vsel %vm2044, %v804, %v1772
        %v2047 = vsel %vm2044, %v940, %v1774
        %v2048 = vsel %vm2044, %v1076, %v1776
        %v2049 = vsel %vm2044, %v1124, %v1778
        %vm2050 = vcmask 261120
        %v2051 = vsel %vm2050, %v2045, %v1790
        %v2052 = vsel %vm2050, %v2046, %v1792
        %v2053 = vsel %vm2050, %v2047, %v1794
        %v2054 = vsel %vm2050, %v2048, %v1796
        %v2055 = vsel %vm2050, %v2049, %v1798
        %vm2056 = vcmask 392192
        %v2057 = vsel %vm2056, %v2051, %v1810
        %v2058 = vsel %vm2056, %v2052, %v1812
        %v2059 = vsel %vm2056, %v2053, %v1814
        %v2060 = vsel %vm2056, %v2054, %v1816
        %v2061 = vsel %vm2056, %v2055, %v1818
        %vm2062 = vcmask 523264
        %v2063 = vsel %vm2062, %v2057, %v1830
        %v2064 = vsel %vm2062, %v2058, %v1832
        %v2065 = vsel %vm2062, %v2059, %v1834
        %v2066 = vsel %vm2062, %v2060, %v1836
        %v2067 = vsel %vm2062, %v2061, %v1838
        %vm2068 = vcmask 654336
        %v2069 = vsel %vm2068, %v2063, %v1850
        %v2070 = vsel %vm2068, %v2064, %v1852
        %v2071 = vsel %vm2068, %v2065, %v1854
        %v2072 = vsel %vm2068, %v2066, %v1856
        %v2073 = vsel %vm2068, %v2067, %v1858
        %vm2074 = vcmask 785408
        %v2075 = vsel %vm2074, %v2069, %v1870
        %v2076 = vsel %vm2074, %v2070, %v1872
        %v2077 = vsel %vm2074, %v2071, %v1874
        %v2078 = vsel %vm2074, %v2072, %v1876
        %v2079 = vsel %vm2074, %v2073, %v1878
        %vm2080 = vcmask 916480
        %v2081 = vsel %vm2080, %v2075, %v1890
        %v2082 = vsel %vm2080, %v2076, %v1892
        %v2083 = vsel %vm2080, %v2077, %v1894
        %v2084 = vsel %vm2080, %v2078, %v1896
        %v2085 = vsel %vm2080, %v2079, %v1898
        %v2086 = vsel %vm2044, %v1280, %v1910
        %v2087 = vsel %vm2044, %v1416, %v1912
        %v2088 = vsel %vm2044, %v1552, %v1914
        %v2089 = vsel %vm2044, %v1688, %v1916
        %v2090 = vsel %vm2044, %v1736, %v1918
        %v2091 = vsel %vm2050, %v2086, %v1930
        %v2092 = vsel %vm2050, %v2087, %v1932
        %v2093 = vsel %vm2050, %v2088, %v1934
        %v2094 = vsel %vm2050, %v2089, %v1936
        %v2095 = vsel %vm2050, %v2090, %v1938
        %v2096 = vsel %vm2056, %v2091, %v1950
        %v2097 = vsel %vm2056, %v2092, %v1952
        %v2098 = vsel %vm2056, %v2093, %v1954
        %v2099 = vsel %vm2056, %v2094, %v1956
        %v2100 = vsel %vm2056, %v2095, %v1958
        %v2101 = vsel %vm2062, %v2096, %v1970
        %v2102 = vsel %vm2062, %v2097, %v1972
        %v2103 = vsel %vm2062, %v2098, %v1974
        %v2104 = vsel %vm2062, %v2099, %v1976
        %v2105 = vsel %vm2062, %v2100, %v1978
        %v2106 = vsel %vm2068, %v2101, %v1990
        %v2107 = vsel %vm2068, %v2102, %v1992
        %v2108 = vsel %vm2068, %v2103, %v1994
        %v2109 = vsel %vm2068, %v2104, %v1996
        %v2110 = vsel %vm2068, %v2105, %v1998
        %v2111 = vsel %vm2074, %v2106, %v2010
        %v2112 = vsel %vm2074, %v2107, %v2012
        %v2113 = vsel %vm2074, %v2108, %v2014
        %v2114 = vsel %vm2074, %v2109, %v2016
        %v2115 = vsel %vm2074, %v2110, %v2018
        %v2116 = vsel %vm2080, %v2111, %v2030
        %v2117 = vsel %vm2080, %v2112, %v2032
        %v2118 = vsel %vm2080, %v2113, %v2034
        %v2119 = vsel %vm2080, %v2114, %v2036
        %v2120 = vsel %vm2080, %v2115, %v2038
        %v2121 = vld [vmem:[%s1] sm:$0xff]
        %vm2122 = vcmask 293888
        %v2124 = vsel %vm2122, %v2121, 0
        %vm2126 = vcmask 1043456
        %v2128 = vsel %vm2126, %v2085, 0
        %v2131 = vsel %vm2126, %v2120, 0
        %2133 = vmatprep.subr.mxu0 %v2116
        %2134 = vmatpush1.msra.mxu0 %v2081
        %2135 = vmatprep.subr.mxu0 %v2117
        %2136 = vmatpush1.msra.mxu0 %v2082
        %2137 = vmatprep.subr.mxu0 %v2118
        %2138 = vmatpush1.msra.mxu0 %v2083
        %2139 = vmatprep.subr.mxu0 %v2119
        %2140 = vmatpush1.msra.mxu0 %v2084
        %2141 = vmatprep.subr.mxu0 %v2131
        %2142 = vmatpush1.msra.mxu0 %v2128
        %2143 = vmatprep.subr.mxu0 0.0
        %2144 = vmatpush1.msra.mxu0 0.0
        %2145 = vmatprep.subr.mxu0 0.0
        %2146 = vmatpush1.msra.mxu0 0.0
        %2147 = vmatprep.subr.mxu0 0.0
        %2148 = vmatpush1.msra.mxu0 0.0
        %2149 = vmatprep.subr.mxu0 0.0
        %2150 = vmatpush1.msra.mxu0 0.0
        %2151 = vmatprep.subr.mxu0 0.0
        %2152 = vmatpush1.msra.mxu0 0.0
        %2153 = vmatprep.subr.mxu0 0.0
        %2154 = vmatpush1.msra.mxu0 0.0
        %2155 = vmatprep.subr.mxu0 0.0
        %2156 = vmatpush1.msra.mxu0 0.0
        %2157 = vmatprep.subr.mxu0 0.0
        %2158 = vmatpush1.msra.mxu0 0.0
        %2159 = vmatprep.subr.mxu0 0.0
        %2160 = vmatpush1.msra.mxu0 0.0
        %2161 = vmatprep.subr.mxu0 0.0
        %2162 = vmatpush1.msra.mxu0 0.0
        %2163 = vmatprep.subr.mxu0 0.0
        %2164 = vmatpush1.msra.mxu0 0.0
        %2165 = vmatprep.subr.mxu0 0.0
        %2166 = vmatpush1.msra.mxu0 0.0
        %2167 = vmatprep.subr.mxu0 0.0
        %2168 = vmatpush1.msra.mxu0 0.0
        %2169 = vmatprep.subr.mxu0 0.0
        %2170 = vmatpush1.msra.mxu0 0.0
        %2171 = vmatprep.subr.mxu0 0.0
        %2172 = vmatpush1.msra.mxu0 0.0
        %2173 = vmatprep.subr.mxu0 0.0
        %2174 = vmatpush1.msra.mxu0 0.0
        %2175 = vmatprep.subr.mxu0 0.0
        %2176 = vmatpush1.msra.mxu0 0.0
        %2177 = vmatprep.subr.mxu0 0.0
        %2178 = vmatpush1.msra.mxu0 0.0
        %2179 = vmatprep.subr.mxu0 0.0
        %2180 = vmatpush1.msra.mxu0 0.0
        %2181 = vmatprep.subr.mxu0 0.0
        %2182 = vmatpush1.msra.mxu0 0.0
        %2183 = vmatprep.subr.mxu0 0.0
        %2184 = vmatpush1.msra.mxu0 0.0
        %2185 = vmatprep.subr.mxu0 0.0
        %2186 = vmatpush1.msra.mxu0 0.0
        %2187 = vmatprep.subr.mxu0 0.0
        %2188 = vmatpush1.msra.mxu0 0.0
        %2189 = vmatprep.subr.mxu0 0.0
        %2190 = vmatpush1.msra.mxu0 0.0
        %2191 = vmatprep.subr.mxu0 0.0
        %2192 = vmatpush1.msra.mxu0 0.0
        %2193 = vmatprep.subr.mxu0 0.0
        %2194 = vmatpush1.msra.mxu0 0.0
        %2195 = vmatprep.subr.mxu0 0.0
        %2196 = vmatpush1.msra.mxu0 0.0
        %2197 = vmatprep.mubr.f32.mxu0 0.0
        %2198 = vmatmul.mubr.f32.gmra.mrb[0].mxu0 %v2124
        %v2199 = vpop.f32.mrb[0].mxu0
        %v2200 = vadd.f32 0.0, %v2199
        %v2201 = vpop.f32.mrb[0].mxu0
        %v2202 = vadd.f32 0.0, %v2201
        %2203 = vdwg.mxu0
        %v2204 = vld [vmem:[#allocation2] sm:$0xff]
        %v2205 = vadd.f32 %v2200, %v2202
        %2206 = vadd.xlane.f32.xlu0 %v2205
        %v2207 = vpop.xlane.xlu0 %2206
        %v2208 = vadd.f32 %v2204, %v2207
        %2209 = vst.msk [vmem:[#allocation2] sm:$0xff] %vm300, %v2208
        %v2210 = vld [vmem:[#allocation3] sm:$0xff]
        %v2211 = vmul.f32 %v2200, %v2200
        %v2212 = vmul.f32 %v2202, %v2202
        %v2213 = vadd.f32 %v2211, %v2212
        %2214 = vadd.xlane.f32.xlu0 %v2213
        %v2215 = vpop.xlane.xlu0 %2214
        %v2216 = vadd.f32 %v2210, %v2215
        %2217 = vst.msk [vmem:[#allocation3] sm:$0xff] %vm300, %v2216
        %s2218 = smul.u32 %s19, 2
        %s2219 = smul.addr %s2218, 8
        %s2220 = scalar_lea.vmem [#allocation7], %s2219
        %2221 = vst [vmem:[%s2220] sm:$0xff] %v2200
        %2222 = vst [vmem:[%s2220 + $0x8] sm:$0xff] %v2202
        %p2223 = scmp.eq.s32.totalorder %s19, 1
        // Predicated region
        $region45: #{tpu_custom_call.1} parent=35 // pred_check
          %p2224 = pneg %p2223
        $region46: #{tpu_custom_call.1} parent=35 // pred_check_branch
          %2226 = sbr.rel (%p2224) target = $region48
        $region47: #{tpu_custom_call.1} parent=35 // pred_region
          %v2227 = vld [vmem:[#allocation2] sm:$0xff]
          %v2228 = vmul.f32 %v2227, 0.001953125
          %v2229 = vld [vmem:[#allocation3] sm:$0xff]
          %v2230 = vmul.f32 %v2229, 0.001953125
          %v2231 = vmul.f32 %v2228, %v2228
          %v2232 = vsub.f32 %v2230, %v2231
          %v2233 = vmax.f32 %v2232, 0.0
          %v2234 = vld [vmem:[%s2] sm:$0xff]
          %v2235 = vadd.f32 %v2233, 1e-05
          %v2236 = vrsqrt.pop %v2235
          %v2237 = vmul.f32 %v2234, %v2236
          %v2238 = vld [vmem:[%s3] sm:$0xff]
          %v2239 = vmul.f32 %v2228, %v2237
          %v2240 = vsub.f32 %v2238, %v2239
          %v2241 = vld [vmem:[#allocation7] sm:$0xff]
          %v2242 = vld [vmem:[#allocation7 + $0x8] sm:$0xff]
          %v2243 = vld [vmem:[#allocation7 + $0x10] sm:$0xff]
          %v2244 = vld [vmem:[#allocation7 + $0x18] sm:$0xff]
          %2246 = vset.pattern.permute.xlu0 0
          %2247 = vperm.xlu0 %2246, %v2237
          %v2248 = vpop.permute.xlu0 %2247
          %v2250 = vmul.f32 %v2241, %v2248
          %v2251 = vmul.f32 %v2242, %v2248
          %v2252 = vmul.f32 %v2243, %v2248
          %v2253 = vmul.f32 %v2244, %v2248
          %2255 = vset.pattern.permute.xlu0 0
          %2256 = vperm.xlu0 %2255, %v2240
          %v2257 = vpop.permute.xlu0 %2256
          %v2259 = vadd.f32 %v2250, %v2257
          %v2260 = vadd.f32 %v2251, %v2257
          %v2261 = vadd.f32 %v2252, %v2257
          %v2262 = vadd.f32 %v2253, %v2257
          %v2263 = vmax.f32 %v2259, 0.0
          %v2264 = vmax.f32 %v2260, 0.0
          %v2265 = vmax.f32 %v2261, 0.0
          %v2266 = vmax.f32 %v2262, 0.0
          %2267 = vst [vmem:[#allocation7] sm:$0xff] %v2263
          %2268 = vst [vmem:[#allocation7 + $0x8] sm:$0xff] %v2264
          %2269 = vst [vmem:[#allocation7 + $0x10] sm:$0xff] %v2265
          %2270 = vst [vmem:[#allocation7 + $0x18] sm:$0xff] %v2266
        $region48: #{tpu_custom_call.1} parent=35 // pred_fallthru
          _
        // Predicated region
        $region49: #{tpu_custom_call.1} parent=35 // pred_check
          %p2271 = pneg %p121
        $region50: #{tpu_custom_call.1} parent=35 // pred_check_branch
          %2273 = sbr.rel (%p2271) target = $region52
        $region51: #{tpu_custom_call.1} parent=35 // pred_region
          %s2275 = ssub.s32 512, 512
          %2276 = vsyncadd [#allocation6], %s2275
          %s2277 = sshll.u32 [#allocation7], 4
          %s2278 = int_to_ptr.vmem [resolvable:$true] %s2277
          %2283 = dma.vmem_to_hbm [thread:$0]  %s2278, 512, %s4, [#allocation6], 256, 256, 16
        $region52: #{tpu_custom_call.1} parent=35 // pred_fallthru
          _
        // Predicated region
        $region53: #{tpu_custom_call.1} parent=35 // pred_check
          %p2284 = pneg %p121
        $region54: #{tpu_custom_call.1} parent=35 // pred_check_branch
          %2286 = sbr.rel (%p2284) target = $region56
        $region55: #{tpu_custom_call.1} parent=35 // pred_region
          %2287 = dma.done [#allocation6], 512
        $region56: #{tpu_custom_call.1} parent=35 // pred_fallthru
          _
      $region36: #{tpu_custom_call.1} parent=5 // pred_fallthru
        _
      %p2288 = scmp.le.s32.totalorder 2, %s14
      // Predicated region
      $region57: #{tpu_custom_call.1} parent=5 // pred_check
        %p2289 = pneg %p2288
      $region58: #{tpu_custom_call.1} parent=5 // pred_check_branch
        %2291 = sbr.rel (%p2289) target = $region60
      $region59: #{tpu_custom_call.1} parent=5 // pred_region
        %s2292 = ssub.s32 %s14, 2
      $region60: #{tpu_custom_call.1} parent=5 // pred_fallthru
        _
    $region6: #{tpu_custom_call.1} parent=1 // loop_footer
      %s18 = sadd.s32 1, %s14
    $region7: #{tpu_custom_call.1} parent=1 // loop_footer_branch
      %13 = sbr.rel target = $region3
    $region8: #{tpu_custom_call.1} parent=1 // loop_exit
      _
    %2293 = vsyncpa [#allocation5], 1
    %s2294 = scalar_lea.sflag [#allocation5], 1
    %2295 = vsyncpa %s2294, 1
    %2296 = vsyncpa [#allocation6], 1
    %s2297 = scalar_lea.sflag [#allocation6], 1
    %2298 = vsyncpa %s2297, 1

</llo_original>
